<compile_context>
chip_gen: v7x
topology: tpu7x:2x2x1
jax: 0.10.0
libtpu: 0.0.40
codegen_flags: <defaults>
</compile_context>

<pallas_src>
import functools

import jax
import jax.numpy as jnp
from jax.experimental import pallas as pl
from jax.experimental.pallas import tpu as pltpu


G = 128  # original rows packed per lane-dense packed row == output lane width


# ----------------------------- kernels ------------------------------------- #

def _mean_fwd_kernel(x_ref, wm_ref, bias_ref, out_ref):
    """Deterministic path (sample=False): sigmoid(x @ w_mean + b), lane-dense."""
    acts = jnp.dot(x_ref[...], wm_ref[...], preferred_element_type=jnp.float32)
    out_ref[...] = jax.nn.sigmoid(acts + bias_ref[...]).astype(out_ref.dtype)


def _sample_fwd_kernel(x_ref, wm_ref, wv_ref, bias_ref, bvar_ref, eps_ref, out_ref):
    """Sampled path (local reparameterization): sigmoid(mean + sqrt(var) * eps)."""
    x = x_ref[...]
    mean_act = (
        jnp.dot(x, wm_ref[...], preferred_element_type=jnp.float32) + bias_ref[...]
    )
    # Square in the input dtype (bf16 VALUs on v6e/v7x; Mosaic legalizes per-vreg on
    # v5e) -> no full-tile f32 temporary, half the variance-matmul LHS bytes.
    xsq = x * x
    var_act = (
        jnp.dot(xsq, wv_ref[...], preferred_element_type=jnp.float32) + bvar_ref[...]
    )
    var_act = jnp.maximum(var_act, 0.0)  # ragged-last-block garbage rows: no NaN
    act = mean_act + jnp.sqrt(var_act) * eps_ref[...]
    out_ref[...] = jax.nn.sigmoid(act).astype(out_ref.dtype)


# ----------------------------- wrapper -------------------------------------- #

@functools.partial(jax.jit, static_argnames=("sample", "tile_rows"))
def bayesian_network_forward(x, params, *, sample=False, eps=None, key=None,
                             tile_rows=None):
    """Forward pass of BayesianNetwork (family='binomial').

    x: (N, P) with P = p - 1 features. Returns (N, 1) probabilities in x.dtype.
    Feeding x as bf16 is the preferred (fastest) calling convention when the
    accuracy budget allows.  sample=True requires either an explicit `eps`
    (N values of N(0,1) noise) or a PRNG `key` to draw it.
    """
    n, p_in = x.shape
    in_dtype = x.dtype
    f32 = jnp.float32

    # ---- parameter glue (tiny; fused under jit with the pallas_call) ----
    mu_w = params["weight_mu"].astype(f32).reshape(p_in)
    rho_w = params["weight_rho"].astype(f32).reshape(p_in)
    lam = params["lambda_logit"].astype(f32).reshape(p_in)
    mu_b = params["bias_mu"].astype(f32).reshape(())
    rho_b = params["bias_rho"].astype(f32).reshape(())

    sigma_w = jax.nn.softplus(rho_w)
    sigma_b = jax.nn.softplus(rho_b)
    alpha_q = jax.nn.sigmoid(lam)

    w_mean = alpha_q * mu_w                                             # (P,)
    w_var = alpha_q * sigma_w**2 + alpha_q * (1.0 - alpha_q) * mu_w**2  # (P,)

    # ---- eps handling (before padding) ----
    if sample:
        if eps is None:
            if key is None:
                raise ValueError("sample=True requires `eps` or a PRNG `key`.")
            eps = jax.random.normal(key, (n,), f32)
        eps = eps.astype(f32).reshape(n)

    # ---- pad N to a multiple of G=128 (zero rows), never degrade packing ----
    n_pad = (-n) % G
    if n_pad:
        x = jnp.pad(x, ((0, n_pad), (0, 0)))
        if sample:
            eps = jnp.pad(eps, (0, n_pad))
    n_tot = n + n_pad
    n_rows = n_tot // G
    w_packed = G * p_in                                   # multiple of 128 for any P

    # ---- lane packing: fold 128 rows into one lane-dense row (free reshape) ----
    x2 = x.reshape(n_rows, w_packed)
    eye = jnp.eye(G, dtype=f32)
    wm2 = jnp.kron(eye, w_mean[:, None]).astype(in_dtype)  # (128*P, 128) block-diag
    bias_row = jnp.full((1, G), mu_b, f32)

    # ---- tile sizing: generation-aware VMEM budget ----
    bytes_per = jnp.dtype(in_dtype).itemsize
    sub = 8 if bytes_per >= 4 else 16          # sublane alignment for tiled blocks

    big_vmem = False
    try:
        # v5e/v6e: 128 MiB VMEM -> bigger tiles; v7x: 64 MiB -> conservative tiles.
        info = pltpu.get_tpu_info()
        big_vmem = getattr(info, "vmem_capacity_bytes", 0) >= 100 * 1024 * 1024
    except Exception:
        big_vmem = False
    x_buf_budget = (16 if big_vmem else 8) * 1024 * 1024   # per x buffer (x2 dbl-buf)
    vmem_limit = (100 if big_vmem else 48) * 1024 * 1024

    if tile_rows is None:
        tile_rows = x_buf_budget // max(1, w_packed * bytes_per)
        tile_rows = max(sub, min(8192, (tile_rows // sub) * sub))
    tile_rows = int(min(tile_rows, n_rows))
    if tile_rows < n_rows:                     # tiled blocks: keep sublane-aligned
        tile_rows = max(sub, (tile_rows // sub) * sub)
    grid = (pl.cdiv(n_rows, tile_rows),)

    x_spec = pl.BlockSpec((tile_rows, w_packed), lambda i: (i, 0))
    w_spec = pl.BlockSpec((w_packed, G), lambda i: (0, 0))     # resident, fetched once
    row_spec = pl.BlockSpec((1, G), lambda i: (0, 0))
    io_spec = pl.BlockSpec((tile_rows, G), lambda i: (i, 0))   # lane-dense output
    out_shape = jax.ShapeDtypeStruct((n_rows, G), in_dtype)
    cparams = pltpu.CompilerParams(
        dimension_semantics=("parallel",),
        vmem_limit_bytes=int(vmem_limit),
    )

    if not sample:
        out2 = pl.pallas_call(
            _mean_fwd_kernel,
            grid=grid,
            in_specs=[x_spec, w_spec, row_spec],
            out_specs=io_spec,
            out_shape=out_shape,
            compiler_params=cparams,
        )(x2, wm2, bias_row)
    else:
        eps2 = eps.reshape(n_rows, G)
        # Variance weights in x dtype so the xsq matmul stays in x dtype
        # (no f32 promotion of the LHS); accumulation is still f32.
        wv2 = jnp.kron(eye, w_var[:, None]).astype(in_dtype)
        bvar_row = jnp.full((1, G), sigma_b**2, f32)
        out2 = pl.pallas_call(
            _sample_fwd_kernel,
            grid=grid,
            in_specs=[x_spec, w_spec, w_spec, row_spec, row_spec, io_spec],
            out_specs=io_spec,
            out_shape=out_shape,
            compiler_params=cparams,
        )(x2, wm2, wv2, bias_row, bvar_row, eps2)

    return out2.reshape(n_tot, 1)[:n]


def init_params(key, p):
    """Deterministic synthetic init matching BayesianLinearFlow(p-1, 1, ...)."""
    p_in = p - 1
    k1, k2, k3 = jax.random.split(key, 3)
    return {
        "weight_mu": 0.01 * jax.random.normal(k1, (1, p_in), jnp.float32),
        "weight_rho": jnp.full((1, p_in), -5.0, jnp.float32),
        "lambda_logit": 0.5 * jax.random.normal(k2, (1, p_in), jnp.float32),
        "bias_mu": 0.01 * jax.random.normal(k3, (1,), jnp.float32),
        "bias_rho": jnp.full((1,), -5.0, jnp.float32),
    }


if __name__ == "__main__":
    key = jax.random.PRNGKey(0)
    kx, kp, ke = jax.random.split(key, 3)

    p = 33            # model "p" -> in_features = p - 1 = 32
    batch = 1600      # deliberately NOT a multiple of 128 -> exercises row padding

    x = jax.random.normal(kx, (batch, p - 1), jnp.float32)
    params = init_params(kp, p)
    eps = jax.random.normal(ke, (batch,), jnp.float32)

    # pure-JAX reference
    sigma_w = jax.nn.softplus(params["weight_rho"])
    sigma_b = jax.nn.softplus(params["bias_rho"])
    alpha_q = jax.nn.sigmoid(params["lambda_logit"])
    w_mean_r = (alpha_q * params["weight_mu"]).reshape(-1, 1)
    w_var_r = (
        alpha_q * sigma_w**2 + alpha_q * (1.0 - alpha_q) * params["weight_mu"] ** 2
    ).reshape(-1, 1)
    mean_ref = x @ w_mean_r + params["bias_mu"][0]
    var_ref = (x * x) @ w_var_r + sigma_b[0] ** 2
    ref_det = jax.nn.sigmoid(mean_ref)
    ref_samp = jax.nn.sigmoid(mean_ref + jnp.sqrt(var_ref) * eps[:, None])

    # deterministic (sample=False) path — the default forward, single-tile grid
    y = jax.block_until_ready(bayesian_network_forward(x, params, sample=False))
    assert y.shape == (batch, 1)
    assert jnp.allclose(y, ref_det, atol=3e-5), "deterministic path mismatch"

    # same path with a small tile to exercise the multi-step pipelined grid
    # (includes a ragged final block)
    y_tiled = jax.block_until_ready(
        bayesian_network_forward(x, params, sample=False, tile_rows=8))
    assert jnp.allclose(y_tiled, ref_det, atol=3e-5), "tiled path mismatch"

    # sampled (local-reparameterization) path with explicit eps
    y_s = jax.block_until_ready(
        bayesian_network_forward(x, params, sample=True, eps=eps))
    assert y_s.shape == (batch, 1)
    assert jnp.allclose(y_s, ref_samp, atol=3e-5), "sampled path mismatch"

    # sampled path, small tiles (ragged last block + var clamp)
    y_s_tiled = jax.block_until_ready(
        bayesian_network_forward(x, params, sample=True, eps=eps, tile_rows=8))
    assert jnp.allclose(y_s_tiled, ref_samp, atol=3e-5), "tiled sampled path mismatch"

    # bf16 activations: preferred calling convention — half the HBM bytes for the
    # dominant x stream and for the (now lane-dense) output stream
    y_bf16 = jax.block_until_ready(
        bayesian_network_forward(x.astype(jnp.bfloat16), params, sample=False))
    assert jnp.allclose(y_bf16.astype(jnp.float32), ref_det, atol=3e-2), \
        "bf16 path mismatch"

    print("KERNEL_OK")
</pallas_src>

<mosaic_0001>
module attributes {stable_mosaic.version = 11 : i64} {
  func.func @_mean_fwd_kernel(%arg0: i32, %arg1: memref<13x4096xf32, #tpu.memory_space<vmem>>, %arg2: memref<4096x128xf32, #tpu.memory_space<vmem>>, %arg3: memref<1x128xf32, #tpu.memory_space<vmem>>, %arg4: memref<13x128xf32, #tpu.memory_space<vmem>>) attributes {dimension_semantics = [#tpu.dimension_semantics<parallel>], iteration_bounds = array<i64: 1>, scalar_prefetch = 0 : i64, scratch_operands = 0 : i64, tpu.core_type = #tpu.core_type<tc>, window_params = [{transform_indices = @transform_0, window_bounds = array<i64: 13, 4096>}, {pipeline_mode = #tpu.pipeline_mode<synchronous>, transform_indices = @transform_1, window_bounds = array<i64: 4096, 128>}, {pipeline_mode = #tpu.pipeline_mode<synchronous>, transform_indices = @transform_2, window_bounds = array<i64: 1, 128>}, {transform_indices = @transform_3, window_bounds = array<i64: 13, 128>}]} {
    %c0 = arith.constant 0 : index
    %c0_0 = arith.constant 0 : index
    %0 = vector.load %arg1[%c0, %c0_0] : memref<13x4096xf32, #tpu.memory_space<vmem>>, vector<13x4096xf32>
    %c0_1 = arith.constant 0 : index
    %c0_2 = arith.constant 0 : index
    %1 = vector.load %arg2[%c0_1, %c0_2] : memref<4096x128xf32, #tpu.memory_space<vmem>>, vector<4096x128xf32>
    %cst = arith.constant dense<0.000000e+00> : vector<13x128xf32>
    %2 = tpu.matmul %0, %1, %cst {dimension_numbers = #tpu.dot_dimension_numbers<[1], [0], [0], [1], [0, 0, 1, 1], [], []>} : vector<13x4096xf32>, vector<4096x128xf32>, vector<13x128xf32> -> vector<13x128xf32>
    %c0_3 = arith.constant 0 : index
    %c0_4 = arith.constant 0 : index
    %3 = vector.load %arg3[%c0_3, %c0_4] : memref<1x128xf32, #tpu.memory_space<vmem>>, vector<1x128xf32>
    %4 = vector.broadcast %3 : vector<1x128xf32> to vector<13x128xf32>
    %5 = arith.addf %2, %4 : vector<13x128xf32>
    %6 = arith.negf %5 : vector<13x128xf32>
    %7 = math.exp %6 : vector<13x128xf32>
    %cst_5 = arith.constant 1.000000e+00 : f32
    %8 = vector.broadcast %cst_5 : f32 to vector<13x128xf32>
    %9 = arith.addf %8, %7 : vector<13x128xf32>
    %10 = arith.divf %8, %9 : vector<13x128xf32>
    %c0_6 = arith.constant 0 : index
    %c0_7 = arith.constant 0 : index
    %11 = vector.load %arg4[%c0_6, %c0_7] : memref<13x128xf32, #tpu.memory_space<vmem>>, vector<13x128xf32>
    tpu.vector_store %arg4[%c0_6, %c0_7], %10 {strides = array<i32>} : memref<13x128xf32, #tpu.memory_space<vmem>>, vector<13x128xf32>,
    return
  }
  func.func @transform_0(%arg0: i32) -> (i32, i32) {
    %c0_i32 = arith.constant 0 : i32
    %c0_i32_0 = arith.constant 0 : i32
    return %arg0, %c0_i32 : i32, i32
  }
  func.func @transform_1(%arg0: i32) -> (i32, i32) {
    %c0_i32 = arith.constant 0 : i32
    %c0_i32_0 = arith.constant 0 : i32
    %c0_i32_1 = arith.constant 0 : i32
    return %c0_i32, %c0_i32_0 : i32, i32
  }
  func.func @transform_2(%arg0: i32) -> (i32, i32) {
    %c0_i32 = arith.constant 0 : i32
    %c0_i32_0 = arith.constant 0 : i32
    %c0_i32_1 = arith.constant 0 : i32
    return %c0_i32, %c0_i32_0 : i32, i32
  }
  func.func @transform_3(%arg0: i32) -> (i32, i32) {
    %c0_i32 = arith.constant 0 : i32
    %c0_i32_0 = arith.constant 0 : i32
    return %arg0, %c0_i32 : i32, i32
  }
}

</mosaic_0001>

<llo_original>
// kernel: bayesian_network_forward.1
$region0: #{bayesian_network_forward.1}
  #allocation0 [shape = 'u32[]', space=smem, size = 0x4, offset = 0x4, fixed_abs, tag = 'smem constant byte address 0x4 - core index']
  #allocation1 [shape = 'u32[144,128]{1,0:T(1,128)}', space=vmem, size = 0x12000, scoped, tag = 'internal scratch']
  %s0 = inlined_call_operand.vmem [shape: f32[13,4096], index: 0, kind: input, shape index: {}]
  %s1 = inlined_call_operand.vmem [shape: f32[4096,128], index: 1, kind: input, shape index: {}]
  %s2 = inlined_call_operand.vmem [shape: f32[1,128], index: 2, kind: input, shape index: {}]
  %s3 = inlined_call_operand.vmem [shape: f32[13,128], index: 3, kind: output, shape index: {}]
  %s4 = sld [smem:[#allocation0]]
  $region22: #{bayesian_network_forward.1} parent=0
    _
  %s6 = ssub.s32 1, %s4
  %s7 = scalar_select 0, %s6, %s4
  // Predicated region
  $region2: #{bayesian_network_forward.1} parent=0 // pred_check
    _
  $region3: #{bayesian_network_forward.1} parent=0 // pred_check_branch
    %9 = sbr.rel (0) target = $region5
  $region4: #{bayesian_network_forward.1} parent=0 // pred_region
    _
  $region5: #{bayesian_network_forward.1} parent=0 // pred_fallthru
    _
  // Predicated region
  $region6: #{bayesian_network_forward.1} parent=0 // pred_check
    _
  $region7: #{bayesian_network_forward.1} parent=0 // pred_check_branch
    %11 = sbr.rel (0) target = $region9
  $region8: #{bayesian_network_forward.1} parent=0 // pred_region
    _
  $region9: #{bayesian_network_forward.1} parent=0 // pred_fallthru
    _
  // Predicated region
  $region10: #{bayesian_network_forward.1} parent=0 // pred_check
    _
  $region11: #{bayesian_network_forward.1} parent=0 // pred_check_branch
    %13 = sbr.rel (0) target = $region13
  $region12: #{bayesian_network_forward.1} parent=0 // pred_region
    _
  $region13: #{bayesian_network_forward.1} parent=0 // pred_fallthru
    _
  %v14 = vld [vmem:[%s0] sm:$0xff]
  %v15 = vld [vmem:[%s0 + $0x8] sm:$0xff]
  %v16 = vld [vmem:[%s0 + $0x10] sm:$0xff]
  %v17 = vld [vmem:[%s0 + $0x18] sm:$0xff]
  %v18 = vld [vmem:[%s0 + $0x20] sm:$0xff]
  %v19 = vld [vmem:[%s0 + $0x28] sm:$0xff]
  %v20 = vld [vmem:[%s0 + $0x30] sm:$0xff]
  %v21 = vld [vmem:[%s0 + $0x38] sm:$0xff]
  %v22 = vld [vmem:[%s0 + $0x40] sm:$0xff]
  %v23 = vld [vmem:[%s0 + $0x48] sm:$0xff]
  %v24 = vld [vmem:[%s0 + $0x50] sm:$0xff]
  %v25 = vld [vmem:[%s0 + $0x58] sm:$0xff]
  %v26 = vld [vmem:[%s0 + $0x60] sm:$0xff]
  %v27 = vld [vmem:[%s0 + $0x68] sm:$0xff]
  %v28 = vld [vmem:[%s0 + $0x70] sm:$0xff]
  %v29 = vld [vmem:[%s0 + $0x78] sm:$0xff]
  %v30 = vld [vmem:[%s0 + $0x80] sm:$0xff]
  %v31 = vld [vmem:[%s0 + $0x88] sm:$0xff]
  %v32 = vld [vmem:[%s0 + $0x90] sm:$0xff]
  %v33 = vld [vmem:[%s0 + $0x98] sm:$0xff]
  %v34 = vld [vmem:[%s0 + $0xa0] sm:$0xff]
  %v35 = vld [vmem:[%s0 + $0xa8] sm:$0xff]
  %v36 = vld [vmem:[%s0 + $0xb0] sm:$0xff]
  %v37 = vld [vmem:[%s0 + $0xb8] sm:$0xff]
  %v38 = vld [vmem:[%s0 + $0xc0] sm:$0xff]
  %v39 = vld [vmem:[%s0 + $0xc8] sm:$0xff]
  %v40 = vld [vmem:[%s0 + $0xd0] sm:$0xff]
  %v41 = vld [vmem:[%s0 + $0xd8] sm:$0xff]
  %v42 = vld [vmem:[%s0 + $0xe0] sm:$0xff]
  %v43 = vld [vmem:[%s0 + $0xe8] sm:$0xff]
  %v44 = vld [vmem:[%s0 + $0xf0] sm:$0xff]
  %v45 = vld [vmem:[%s0 + $0xf8] sm:$0xff]
  %v46 = vld [vmem:[%s0 + $0x100] sm:$0x1f]
  %v47 = vld [vmem:[%s0 + $0x108] sm:$0x1f]
  %v48 = vld [vmem:[%s0 + $0x110] sm:$0x1f]
  %v49 = vld [vmem:[%s0 + $0x118] sm:$0x1f]
  %v50 = vld [vmem:[%s0 + $0x120] sm:$0x1f]
  %v51 = vld [vmem:[%s0 + $0x128] sm:$0x1f]
  %v52 = vld [vmem:[%s0 + $0x130] sm:$0x1f]
  %v53 = vld [vmem:[%s0 + $0x138] sm:$0x1f]
  %v54 = vld [vmem:[%s0 + $0x140] sm:$0x1f]
  %v55 = vld [vmem:[%s0 + $0x148] sm:$0x1f]
  %v56 = vld [vmem:[%s0 + $0x150] sm:$0x1f]
  %v57 = vld [vmem:[%s0 + $0x158] sm:$0x1f]
  %v58 = vld [vmem:[%s0 + $0x160] sm:$0x1f]
  %v59 = vld [vmem:[%s0 + $0x168] sm:$0x1f]
  %v60 = vld [vmem:[%s0 + $0x170] sm:$0x1f]
  %v61 = vld [vmem:[%s0 + $0x178] sm:$0x1f]
  %v62 = vld [vmem:[%s0 + $0x180] sm:$0x1f]
  %v63 = vld [vmem:[%s0 + $0x188] sm:$0x1f]
  %v64 = vld [vmem:[%s0 + $0x190] sm:$0x1f]
  %v65 = vld [vmem:[%s0 + $0x198] sm:$0x1f]
  %v66 = vld [vmem:[%s0 + $0x1a0] sm:$0x1f]
  %v67 = vld [vmem:[%s0 + $0x1a8] sm:$0x1f]
  %v68 = vld [vmem:[%s0 + $0x1b0] sm:$0x1f]
  %v69 = vld [vmem:[%s0 + $0x1b8] sm:$0x1f]
  %v70 = vld [vmem:[%s0 + $0x1c0] sm:$0x1f]
  %v71 = vld [vmem:[%s0 + $0x1c8] sm:$0x1f]
  %v72 = vld [vmem:[%s0 + $0x1d0] sm:$0x1f]
  %v73 = vld [vmem:[%s0 + $0x1d8] sm:$0x1f]
  %v74 = vld [vmem:[%s0 + $0x1e0] sm:$0x1f]
  %v75 = vld [vmem:[%s0 + $0x1e8] sm:$0x1f]
  %v76 = vld [vmem:[%s0 + $0x1f0] sm:$0x1f]
  %v77 = vld [vmem:[%s0 + $0x1f8] sm:$0x1f]
  %v78 = vld [vmem:[%s1] sm:$0xff]
  %v79 = vld [vmem:[%s1 + $0x8] sm:$0xff]
  %v80 = vld [vmem:[%s1 + $0x10] sm:$0xff]
  %v81 = vld [vmem:[%s1 + $0x18] sm:$0xff]
  %v82 = vld [vmem:[%s1 + $0x20] sm:$0xff]
  %v83 = vld [vmem:[%s1 + $0x28] sm:$0xff]
  %v84 = vld [vmem:[%s1 + $0x30] sm:$0xff]
  %v85 = vld [vmem:[%s1 + $0x38] sm:$0xff]
  %v86 = vld [vmem:[%s1 + $0x40] sm:$0xff]
  %v87 = vld [vmem:[%s1 + $0x48] sm:$0xff]
  %v88 = vld [vmem:[%s1 + $0x50] sm:$0xff]
  %v89 = vld [vmem:[%s1 + $0x58] sm:$0xff]
  %v90 = vld [vmem:[%s1 + $0x60] sm:$0xff]
  %v91 = vld [vmem:[%s1 + $0x68] sm:$0xff]
  %v92 = vld [vmem:[%s1 + $0x70] sm:$0xff]
  %v93 = vld [vmem:[%s1 + $0x78] sm:$0xff]
  %v94 = vld [vmem:[%s1 + $0x80] sm:$0xff]
  %v95 = vld [vmem:[%s1 + $0x88] sm:$0xff]
  %v96 = vld [vmem:[%s1 + $0x90] sm:$0xff]
  %v97 = vld [vmem:[%s1 + $0x98] sm:$0xff]
  %v98 = vld [vmem:[%s1 + $0xa0] sm:$0xff]
  %v99 = vld [vmem:[%s1 + $0xa8] sm:$0xff]
  %v100 = vld [vmem:[%s1 + $0xb0] sm:$0xff]
  %v101 = vld [vmem:[%s1 + $0xb8] sm:$0xff]
  %v102 = vld [vmem:[%s1 + $0xc0] sm:$0xff]
  %v103 = vld [vmem:[%s1 + $0xc8] sm:$0xff]
  %v104 = vld [vmem:[%s1 + $0xd0] sm:$0xff]
  %v105 = vld [vmem:[%s1 + $0xd8] sm:$0xff]
  %v106 = vld [vmem:[%s1 + $0xe0] sm:$0xff]
  %v107 = vld [vmem:[%s1 + $0xe8] sm:$0xff]
  %v108 = vld [vmem:[%s1 + $0xf0] sm:$0xff]
  %v109 = vld [vmem:[%s1 + $0xf8] sm:$0xff]
  %v110 = vld [vmem:[%s1 + $0x100] sm:$0xff]
  %v111 = vld [vmem:[%s1 + $0x108] sm:$0xff]
  %v112 = vld [vmem:[%s1 + $0x110] sm:$0xff]
  %v113 = vld [vmem:[%s1 + $0x118] sm:$0xff]
  %v114 = vld [vmem:[%s1 + $0x120] sm:$0xff]
  %v115 = vld [vmem:[%s1 + $0x128] sm:$0xff]
  %v116 = vld [vmem:[%s1 + $0x130] sm:$0xff]
  %v117 = vld [vmem:[%s1 + $0x138] sm:$0xff]
  %v118 = vld [vmem:[%s1 + $0x140] sm:$0xff]
  %v119 = vld [vmem:[%s1 + $0x148] sm:$0xff]
  %v120 = vld [vmem:[%s1 + $0x150] sm:$0xff]
  %v121 = vld [vmem:[%s1 + $0x158] sm:$0xff]
  %v122 = vld [vmem:[%s1 + $0x160] sm:$0xff]
  %v123 = vld [vmem:[%s1 + $0x168] sm:$0xff]
  %v124 = vld [vmem:[%s1 + $0x170] sm:$0xff]
  %v125 = vld [vmem:[%s1 + $0x178] sm:$0xff]
  %v126 = vld [vmem:[%s1 + $0x180] sm:$0xff]
  %v127 = vld [vmem:[%s1 + $0x188] sm:$0xff]
  %v128 = vld [vmem:[%s1 + $0x190] sm:$0xff]
  %v129 = vld [vmem:[%s1 + $0x198] sm:$0xff]
  %v130 = vld [vmem:[%s1 + $0x1a0] sm:$0xff]
  %v131 = vld [vmem:[%s1 + $0x1a8] sm:$0xff]
  %v132 = vld [vmem:[%s1 + $0x1b0] sm:$0xff]
  %v133 = vld [vmem:[%s1 + $0x1b8] sm:$0xff]
  %v134 = vld [vmem:[%s1 + $0x1c0] sm:$0xff]
  %v135 = vld [vmem:[%s1 + $0x1c8] sm:$0xff]
  %v136 = vld [vmem:[%s1 + $0x1d0] sm:$0xff]
  %v137 = vld [vmem:[%s1 + $0x1d8] sm:$0xff]
  %v138 = vld [vmem:[%s1 + $0x1e0] sm:$0xff]
  %v139 = vld [vmem:[%s1 + $0x1e8] sm:$0xff]
  %v140 = vld [vmem:[%s1 + $0x1f0] sm:$0xff]
  %v141 = vld [vmem:[%s1 + $0x1f8] sm:$0xff]
  %v142 = vld [vmem:[%s1 + $0x200] sm:$0xff]
  %v143 = vld [vmem:[%s1 + $0x208] sm:$0xff]
  %v144 = vld [vmem:[%s1 + $0x210] sm:$0xff]
  %v145 = vld [vmem:[%s1 + $0x218] sm:$0xff]
  %v146 = vld [vmem:[%s1 + $0x220] sm:$0xff]
  %v147 = vld [vmem:[%s1 + $0x228] sm:$0xff]
  %v148 = vld [vmem:[%s1 + $0x230] sm:$0xff]
  %v149 = vld [vmem:[%s1 + $0x238] sm:$0xff]
  %v150 = vld [vmem:[%s1 + $0x240] sm:$0xff]
  %v151 = vld [vmem:[%s1 + $0x248] sm:$0xff]
  %v152 = vld [vmem:[%s1 + $0x250] sm:$0xff]
  %v153 = vld [vmem:[%s1 + $0x258] sm:$0xff]
  %v154 = vld [vmem:[%s1 + $0x260] sm:$0xff]
  %v155 = vld [vmem:[%s1 + $0x268] sm:$0xff]
  %v156 = vld [vmem:[%s1 + $0x270] sm:$0xff]
  %v157 = vld [vmem:[%s1 + $0x278] sm:$0xff]
  %v158 = vld [vmem:[%s1 + $0x280] sm:$0xff]
  %v159 = vld [vmem:[%s1 + $0x288] sm:$0xff]
  %v160 = vld [vmem:[%s1 + $0x290] sm:$0xff]
  %v161 = vld [vmem:[%s1 + $0x298] sm:$0xff]
  %v162 = vld [vmem:[%s1 + $0x2a0] sm:$0xff]
  %v163 = vld [vmem:[%s1 + $0x2a8] sm:$0xff]
  %v164 = vld [vmem:[%s1 + $0x2b0] sm:$0xff]
  %v165 = vld [vmem:[%s1 + $0x2b8] sm:$0xff]
  %v166 = vld [vmem:[%s1 + $0x2c0] sm:$0xff]
  %v167 = vld [vmem:[%s1 + $0x2c8] sm:$0xff]
  %v168 = vld [vmem:[%s1 + $0x2d0] sm:$0xff]
  %v169 = vld [vmem:[%s1 + $0x2d8] sm:$0xff]
  %v170 = vld [vmem:[%s1 + $0x2e0] sm:$0xff]
  %v171 = vld [vmem:[%s1 + $0x2e8] sm:$0xff]
  %v172 = vld [vmem:[%s1 + $0x2f0] sm:$0xff]
  %v173 = vld [vmem:[%s1 + $0x2f8] sm:$0xff]
  %v174 = vld [vmem:[%s1 + $0x300] sm:$0xff]
  %v175 = vld [vmem:[%s1 + $0x308] sm:$0xff]
  %v176 = vld [vmem:[%s1 + $0x310] sm:$0xff]
  %v177 = vld [vmem:[%s1 + $0x318] sm:$0xff]
  %v178 = vld [vmem:[%s1 + $0x320] sm:$0xff]
  %v179 = vld [vmem:[%s1 + $0x328] sm:$0xff]
  %v180 = vld [vmem:[%s1 + $0x330] sm:$0xff]
  %v181 = vld [vmem:[%s1 + $0x338] sm:$0xff]
  %v182 = vld [vmem:[%s1 + $0x340] sm:$0xff]
  %v183 = vld [vmem:[%s1 + $0x348] sm:$0xff]
  %v184 = vld [vmem:[%s1 + $0x350] sm:$0xff]
  %v185 = vld [vmem:[%s1 + $0x358] sm:$0xff]
  %v186 = vld [vmem:[%s1 + $0x360] sm:$0xff]
  %v187 = vld [vmem:[%s1 + $0x368] sm:$0xff]
  %v188 = vld [vmem:[%s1 + $0x370] sm:$0xff]
  %v189 = vld [vmem:[%s1 + $0x378] sm:$0xff]
  %v190 = vld [vmem:[%s1 + $0x380] sm:$0xff]
  %v191 = vld [vmem:[%s1 + $0x388] sm:$0xff]
  %v192 = vld [vmem:[%s1 + $0x390] sm:$0xff]
  %v193 = vld [vmem:[%s1 + $0x398] sm:$0xff]
  %v194 = vld [vmem:[%s1 + $0x3a0] sm:$0xff]
  %v195 = vld [vmem:[%s1 + $0x3a8] sm:$0xff]
  %v196 = vld [vmem:[%s1 + $0x3b0] sm:$0xff]
  %v197 = vld [vmem:[%s1 + $0x3b8] sm:$0xff]
  %v198 = vld [vmem:[%s1 + $0x3c0] sm:$0xff]
  %v199 = vld [vmem:[%s1 + $0x3c8] sm:$0xff]
  %v200 = vld [vmem:[%s1 + $0x3d0] sm:$0xff]
  %v201 = vld [vmem:[%s1 + $0x3d8] sm:$0xff]
  %v202 = vld [vmem:[%s1 + $0x3e0] sm:$0xff]
  %v203 = vld [vmem:[%s1 + $0x3e8] sm:$0xff]
  %v204 = vld [vmem:[%s1 + $0x3f0] sm:$0xff]
  %v205 = vld [vmem:[%s1 + $0x3f8] sm:$0xff]
  %v206 = vld [vmem:[%s1 + $0x400] sm:$0xff]
  %v207 = vld [vmem:[%s1 + $0x408] sm:$0xff]
  %v208 = vld [vmem:[%s1 + $0x410] sm:$0xff]
  %v209 = vld [vmem:[%s1 + $0x418] sm:$0xff]
  %v210 = vld [vmem:[%s1 + $0x420] sm:$0xff]
  %v211 = vld [vmem:[%s1 + $0x428] sm:$0xff]
  %v212 = vld [vmem:[%s1 + $0x430] sm:$0xff]
  %v213 = vld [vmem:[%s1 + $0x438] sm:$0xff]
  %v214 = vld [vmem:[%s1 + $0x440] sm:$0xff]
  %v215 = vld [vmem:[%s1 + $0x448] sm:$0xff]
  %v216 = vld [vmem:[%s1 + $0x450] sm:$0xff]
  %v217 = vld [vmem:[%s1 + $0x458] sm:$0xff]
  %v218 = vld [vmem:[%s1 + $0x460] sm:$0xff]
  %v219 = vld [vmem:[%s1 + $0x468] sm:$0xff]
  %v220 = vld [vmem:[%s1 + $0x470] sm:$0xff]
  %v221 = vld [vmem:[%s1 + $0x478] sm:$0xff]
  %v222 = vld [vmem:[%s1 + $0x480] sm:$0xff]
  %v223 = vld [vmem:[%s1 + $0x488] sm:$0xff]
  %v224 = vld [vmem:[%s1 + $0x490] sm:$0xff]
  %v225 = vld [vmem:[%s1 + $0x498] sm:$0xff]
  %v226 = vld [vmem:[%s1 + $0x4a0] sm:$0xff]
  %v227 = vld [vmem:[%s1 + $0x4a8] sm:$0xff]
  %v228 = vld [vmem:[%s1 + $0x4b0] sm:$0xff]
  %v229 = vld [vmem:[%s1 + $0x4b8] sm:$0xff]
  %v230 = vld [vmem:[%s1 + $0x4c0] sm:$0xff]
  %v231 = vld [vmem:[%s1 + $0x4c8] sm:$0xff]
  %v232 = vld [vmem:[%s1 + $0x4d0] sm:$0xff]
  %v233 = vld [vmem:[%s1 + $0x4d8] sm:$0xff]
  %v234 = vld [vmem:[%s1 + $0x4e0] sm:$0xff]
  %v235 = vld [vmem:[%s1 + $0x4e8] sm:$0xff]
  %v236 = vld [vmem:[%s1 + $0x4f0] sm:$0xff]
  %v237 = vld [vmem:[%s1 + $0x4f8] sm:$0xff]
  %v238 = vld [vmem:[%s1 + $0x500] sm:$0xff]
  %v239 = vld [vmem:[%s1 + $0x508] sm:$0xff]
  %v240 = vld [vmem:[%s1 + $0x510] sm:$0xff]
  %v241 = vld [vmem:[%s1 + $0x518] sm:$0xff]
  %v242 = vld [vmem:[%s1 + $0x520] sm:$0xff]
  %v243 = vld [vmem:[%s1 + $0x528] sm:$0xff]
  %v244 = vld [vmem:[%s1 + $0x530] sm:$0xff]
  %v245 = vld [vmem:[%s1 + $0x538] sm:$0xff]
  %v246 = vld [vmem:[%s1 + $0x540] sm:$0xff]
  %v247 = vld [vmem:[%s1 + $0x548] sm:$0xff]
  %v248 = vld [vmem:[%s1 + $0x550] sm:$0xff]
  %v249 = vld [vmem:[%s1 + $0x558] sm:$0xff]
  %v250 = vld [vmem:[%s1 + $0x560] sm:$0xff]
  %v251 = vld [vmem:[%s1 + $0x568] sm:$0xff]
  %v252 = vld [vmem:[%s1 + $0x570] sm:$0xff]
  %v253 = vld [vmem:[%s1 + $0x578] sm:$0xff]
  %v254 = vld [vmem:[%s1 + $0x580] sm:$0xff]
  %v255 = vld [vmem:[%s1 + $0x588] sm:$0xff]
  %v256 = vld [vmem:[%s1 + $0x590] sm:$0xff]
  %v257 = vld [vmem:[%s1 + $0x598] sm:$0xff]
  %v258 = vld [vmem:[%s1 + $0x5a0] sm:$0xff]
  %v259 = vld [vmem:[%s1 + $0x5a8] sm:$0xff]
  %v260 = vld [vmem:[%s1 + $0x5b0] sm:$0xff]
  %v261 = vld [vmem:[%s1 + $0x5b8] sm:$0xff]
  %v262 = vld [vmem:[%s1 + $0x5c0] sm:$0xff]
  %v263 = vld [vmem:[%s1 + $0x5c8] sm:$0xff]
  %v264 = vld [vmem:[%s1 + $0x5d0] sm:$0xff]
  %v265 = vld [vmem:[%s1 + $0x5d8] sm:$0xff]
  %v266 = vld [vmem:[%s1 + $0x5e0] sm:$0xff]
  %v267 = vld [vmem:[%s1 + $0x5e8] sm:$0xff]
  %v268 = vld [vmem:[%s1 + $0x5f0] sm:$0xff]
  %v269 = vld [vmem:[%s1 + $0x5f8] sm:$0xff]
  %v270 = vld [vmem:[%s1 + $0x600] sm:$0xff]
  %v271 = vld [vmem:[%s1 + $0x608] sm:$0xff]
  %v272 = vld [vmem:[%s1 + $0x610] sm:$0xff]
  %v273 = vld [vmem:[%s1 + $0x618] sm:$0xff]
  %v274 = vld [vmem:[%s1 + $0x620] sm:$0xff]
  %v275 = vld [vmem:[%s1 + $0x628] sm:$0xff]
  %v276 = vld [vmem:[%s1 + $0x630] sm:$0xff]
  %v277 = vld [vmem:[%s1 + $0x638] sm:$0xff]
  %v278 = vld [vmem:[%s1 + $0x640] sm:$0xff]
  %v279 = vld [vmem:[%s1 + $0x648] sm:$0xff]
  %v280 = vld [vmem:[%s1 + $0x650] sm:$0xff]
  %v281 = vld [vmem:[%s1 + $0x658] sm:$0xff]
  %v282 = vld [vmem:[%s1 + $0x660] sm:$0xff]
  %v283 = vld [vmem:[%s1 + $0x668] sm:$0xff]
  %v284 = vld [vmem:[%s1 + $0x670] sm:$0xff]
  %v285 = vld [vmem:[%s1 + $0x678] sm:$0xff]
  %v286 = vld [vmem:[%s1 + $0x680] sm:$0xff]
  %v287 = vld [vmem:[%s1 + $0x688] sm:$0xff]
  %v288 = vld [vmem:[%s1 + $0x690] sm:$0xff]
  %v289 = vld [vmem:[%s1 + $0x698] sm:$0xff]
  %v290 = vld [vmem:[%s1 + $0x6a0] sm:$0xff]
  %v291 = vld [vmem:[%s1 + $0x6a8] sm:$0xff]
  %v292 = vld [vmem:[%s1 + $0x6b0] sm:$0xff]
  %v293 = vld [vmem:[%s1 + $0x6b8] sm:$0xff]
  %v294 = vld [vmem:[%s1 + $0x6c0] sm:$0xff]
  %v295 = vld [vmem:[%s1 + $0x6c8] sm:$0xff]
  %v296 = vld [vmem:[%s1 + $0x6d0] sm:$0xff]
  %v297 = vld [vmem:[%s1 + $0x6d8] sm:$0xff]
  %v298 = vld [vmem:[%s1 + $0x6e0] sm:$0xff]
  %v299 = vld [vmem:[%s1 + $0x6e8] sm:$0xff]
  %v300 = vld [vmem:[%s1 + $0x6f0] sm:$0xff]
  %v301 = vld [vmem:[%s1 + $0x6f8] sm:$0xff]
  %v302 = vld [vmem:[%s1 + $0x700] sm:$0xff]
  %v303 = vld [vmem:[%s1 + $0x708] sm:$0xff]
  %v304 = vld [vmem:[%s1 + $0x710] sm:$0xff]
  %v305 = vld [vmem:[%s1 + $0x718] sm:$0xff]
  %v306 = vld [vmem:[%s1 + $0x720] sm:$0xff]
  %v307 = vld [vmem:[%s1 + $0x728] sm:$0xff]
  %v308 = vld [vmem:[%s1 + $0x730] sm:$0xff]
  %v309 = vld [vmem:[%s1 + $0x738] sm:$0xff]
  %v310 = vld [vmem:[%s1 + $0x740] sm:$0xff]
  %v311 = vld [vmem:[%s1 + $0x748] sm:$0xff]
  %v312 = vld [vmem:[%s1 + $0x750] sm:$0xff]
  %v313 = vld [vmem:[%s1 + $0x758] sm:$0xff]
  %v314 = vld [vmem:[%s1 + $0x760] sm:$0xff]
  %v315 = vld [vmem:[%s1 + $0x768] sm:$0xff]
  %v316 = vld [vmem:[%s1 + $0x770] sm:$0xff]
  %v317 = vld [vmem:[%s1 + $0x778] sm:$0xff]
  %v318 = vld [vmem:[%s1 + $0x780] sm:$0xff]
  %v319 = vld [vmem:[%s1 + $0x788] sm:$0xff]
  %v320 = vld [vmem:[%s1 + $0x790] sm:$0xff]
  %v321 = vld [vmem:[%s1 + $0x798] sm:$0xff]
  %v322 = vld [vmem:[%s1 + $0x7a0] sm:$0xff]
  %v323 = vld [vmem:[%s1 + $0x7a8] sm:$0xff]
  %v324 = vld [vmem:[%s1 + $0x7b0] sm:$0xff]
  %v325 = vld [vmem:[%s1 + $0x7b8] sm:$0xff]
  %v326 = vld [vmem:[%s1 + $0x7c0] sm:$0xff]
  %v327 = vld [vmem:[%s1 + $0x7c8] sm:$0xff]
  %v328 = vld [vmem:[%s1 + $0x7d0] sm:$0xff]
  %v329 = vld [vmem:[%s1 + $0x7d8] sm:$0xff]
  %v330 = vld [vmem:[%s1 + $0x7e0] sm:$0xff]
  %v331 = vld [vmem:[%s1 + $0x7e8] sm:$0xff]
  %v332 = vld [vmem:[%s1 + $0x7f0] sm:$0xff]
  %v333 = vld [vmem:[%s1 + $0x7f8] sm:$0xff]
  %v334 = vld [vmem:[%s1 + $0x800] sm:$0xff]
  %v335 = vld [vmem:[%s1 + $0x808] sm:$0xff]
  %v336 = vld [vmem:[%s1 + $0x810] sm:$0xff]
  %v337 = vld [vmem:[%s1 + $0x818] sm:$0xff]
  %v338 = vld [vmem:[%s1 + $0x820] sm:$0xff]
  %v339 = vld [vmem:[%s1 + $0x828] sm:$0xff]
  %v340 = vld [vmem:[%s1 + $0x830] sm:$0xff]
  %v341 = vld [vmem:[%s1 + $0x838] sm:$0xff]
  %v342 = vld [vmem:[%s1 + $0x840] sm:$0xff]
  %v343 = vld [vmem:[%s1 + $0x848] sm:$0xff]
  %v344 = vld [vmem:[%s1 + $0x850] sm:$0xff]
  %v345 = vld [vmem:[%s1 + $0x858] sm:$0xff]
  %v346 = vld [vmem:[%s1 + $0x860] sm:$0xff]
  %v347 = vld [vmem:[%s1 + $0x868] sm:$0xff]
  %v348 = vld [vmem:[%s1 + $0x870] sm:$0xff]
  %v349 = vld [vmem:[%s1 + $0x878] sm:$0xff]
  %v350 = vld [vmem:[%s1 + $0x880] sm:$0xff]
  %v351 = vld [vmem:[%s1 + $0x888] sm:$0xff]
  %v352 = vld [vmem:[%s1 + $0x890] sm:$0xff]
  %v353 = vld [vmem:[%s1 + $0x898] sm:$0xff]
  %v354 = vld [vmem:[%s1 + $0x8a0] sm:$0xff]
  %v355 = vld [vmem:[%s1 + $0x8a8] sm:$0xff]
  %v356 = vld [vmem:[%s1 + $0x8b0] sm:$0xff]
  %v357 = vld [vmem:[%s1 + $0x8b8] sm:$0xff]
  %v358 = vld [vmem:[%s1 + $0x8c0] sm:$0xff]
  %v359 = vld [vmem:[%s1 + $0x8c8] sm:$0xff]
  %v360 = vld [vmem:[%s1 + $0x8d0] sm:$0xff]
  %v361 = vld [vmem:[%s1 + $0x8d8] sm:$0xff]
  %v362 = vld [vmem:[%s1 + $0x8e0] sm:$0xff]
  %v363 = vld [vmem:[%s1 + $0x8e8] sm:$0xff]
  %v364 = vld [vmem:[%s1 + $0x8f0] sm:$0xff]
  %v365 = vld [vmem:[%s1 + $0x8f8] sm:$0xff]
  %v366 = vld [vmem:[%s1 + $0x900] sm:$0xff]
  %v367 = vld [vmem:[%s1 + $0x908] sm:$0xff]
  %v368 = vld [vmem:[%s1 + $0x910] sm:$0xff]
  %v369 = vld [vmem:[%s1 + $0x918] sm:$0xff]
  %v370 = vld [vmem:[%s1 + $0x920] sm:$0xff]
  %v371 = vld [vmem:[%s1 + $0x928] sm:$0xff]
  %v372 = vld [vmem:[%s1 + $0x930] sm:$0xff]
  %v373 = vld [vmem:[%s1 + $0x938] sm:$0xff]
  %v374 = vld [vmem:[%s1 + $0x940] sm:$0xff]
  %v375 = vld [vmem:[%s1 + $0x948] sm:$0xff]
  %v376 = vld [vmem:[%s1 + $0x950] sm:$0xff]
  %v377 = vld [vmem:[%s1 + $0x958] sm:$0xff]
  %v378 = vld [vmem:[%s1 + $0x960] sm:$0xff]
  %v379 = vld [vmem:[%s1 + $0x968] sm:$0xff]
  %v380 = vld [vmem:[%s1 + $0x970] sm:$0xff]
  %v381 = vld [vmem:[%s1 + $0x978] sm:$0xff]
  %v382 = vld [vmem:[%s1 + $0x980] sm:$0xff]
  %v383 = vld [vmem:[%s1 + $0x988] sm:$0xff]
  %v384 = vld [vmem:[%s1 + $0x990] sm:$0xff]
  %v385 = vld [vmem:[%s1 + $0x998] sm:$0xff]
  %v386 = vld [vmem:[%s1 + $0x9a0] sm:$0xff]
  %v387 = vld [vmem:[%s1 + $0x9a8] sm:$0xff]
  %v388 = vld [vmem:[%s1 + $0x9b0] sm:$0xff]
  %v389 = vld [vmem:[%s1 + $0x9b8] sm:$0xff]
  %v390 = vld [vmem:[%s1 + $0x9c0] sm:$0xff]
  %v391 = vld [vmem:[%s1 + $0x9c8] sm:$0xff]
  %v392 = vld [vmem:[%s1 + $0x9d0] sm:$0xff]
  %v393 = vld [vmem:[%s1 + $0x9d8] sm:$0xff]
  %v394 = vld [vmem:[%s1 + $0x9e0] sm:$0xff]
  %v395 = vld [vmem:[%s1 + $0x9e8] sm:$0xff]
  %v396 = vld [vmem:[%s1 + $0x9f0] sm:$0xff]
  %v397 = vld [vmem:[%s1 + $0x9f8] sm:$0xff]
  %v398 = vld [vmem:[%s1 + $0xa00] sm:$0xff]
  %v399 = vld [vmem:[%s1 + $0xa08] sm:$0xff]
  %v400 = vld [vmem:[%s1 + $0xa10] sm:$0xff]
  %v401 = vld [vmem:[%s1 + $0xa18] sm:$0xff]
  %v402 = vld [vmem:[%s1 + $0xa20] sm:$0xff]
  %v403 = vld [vmem:[%s1 + $0xa28] sm:$0xff]
  %v404 = vld [vmem:[%s1 + $0xa30] sm:$0xff]
  %v405 = vld [vmem:[%s1 + $0xa38] sm:$0xff]
  %v406 = vld [vmem:[%s1 + $0xa40] sm:$0xff]
  %v407 = vld [vmem:[%s1 + $0xa48] sm:$0xff]
  %v408 = vld [vmem:[%s1 + $0xa50] sm:$0xff]
  %v409 = vld [vmem:[%s1 + $0xa58] sm:$0xff]
  %v410 = vld [vmem:[%s1 + $0xa60] sm:$0xff]
  %v411 = vld [vmem:[%s1 + $0xa68] sm:$0xff]
  %v412 = vld [vmem:[%s1 + $0xa70] sm:$0xff]
  %v413 = vld [vmem:[%s1 + $0xa78] sm:$0xff]
  %v414 = vld [vmem:[%s1 + $0xa80] sm:$0xff]
  %v415 = vld [vmem:[%s1 + $0xa88] sm:$0xff]
  %v416 = vld [vmem:[%s1 + $0xa90] sm:$0xff]
  %v417 = vld [vmem:[%s1 + $0xa98] sm:$0xff]
  %v418 = vld [vmem:[%s1 + $0xaa0] sm:$0xff]
  %v419 = vld [vmem:[%s1 + $0xaa8] sm:$0xff]
  %v420 = vld [vmem:[%s1 + $0xab0] sm:$0xff]
  %v421 = vld [vmem:[%s1 + $0xab8] sm:$0xff]
  %v422 = vld [vmem:[%s1 + $0xac0] sm:$0xff]
  %v423 = vld [vmem:[%s1 + $0xac8] sm:$0xff]
  %v424 = vld [vmem:[%s1 + $0xad0] sm:$0xff]
  %v425 = vld [vmem:[%s1 + $0xad8] sm:$0xff]
  %v426 = vld [vmem:[%s1 + $0xae0] sm:$0xff]
  %v427 = vld [vmem:[%s1 + $0xae8] sm:$0xff]
  %v428 = vld [vmem:[%s1 + $0xaf0] sm:$0xff]
  %v429 = vld [vmem:[%s1 + $0xaf8] sm:$0xff]
  %v430 = vld [vmem:[%s1 + $0xb00] sm:$0xff]
  %v431 = vld [vmem:[%s1 + $0xb08] sm:$0xff]
  %v432 = vld [vmem:[%s1 + $0xb10] sm:$0xff]
  %v433 = vld [vmem:[%s1 + $0xb18] sm:$0xff]
  %v434 = vld [vmem:[%s1 + $0xb20] sm:$0xff]
  %v435 = vld [vmem:[%s1 + $0xb28] sm:$0xff]
  %v436 = vld [vmem:[%s1 + $0xb30] sm:$0xff]
  %v437 = vld [vmem:[%s1 + $0xb38] sm:$0xff]
  %v438 = vld [vmem:[%s1 + $0xb40] sm:$0xff]
  %v439 = vld [vmem:[%s1 + $0xb48] sm:$0xff]
  %v440 = vld [vmem:[%s1 + $0xb50] sm:$0xff]
  %v441 = vld [vmem:[%s1 + $0xb58] sm:$0xff]
  %v442 = vld [vmem:[%s1 + $0xb60] sm:$0xff]
  %v443 = vld [vmem:[%s1 + $0xb68] sm:$0xff]
  %v444 = vld [vmem:[%s1 + $0xb70] sm:$0xff]
  %v445 = vld [vmem:[%s1 + $0xb78] sm:$0xff]
  %v446 = vld [vmem:[%s1 + $0xb80] sm:$0xff]
  %v447 = vld [vmem:[%s1 + $0xb88] sm:$0xff]
  %v448 = vld [vmem:[%s1 + $0xb90] sm:$0xff]
  %v449 = vld [vmem:[%s1 + $0xb98] sm:$0xff]
  %v450 = vld [vmem:[%s1 + $0xba0] sm:$0xff]
  %v451 = vld [vmem:[%s1 + $0xba8] sm:$0xff]
  %v452 = vld [vmem:[%s1 + $0xbb0] sm:$0xff]
  %v453 = vld [vmem:[%s1 + $0xbb8] sm:$0xff]
  %v454 = vld [vmem:[%s1 + $0xbc0] sm:$0xff]
  %v455 = vld [vmem:[%s1 + $0xbc8] sm:$0xff]
  %v456 = vld [vmem:[%s1 + $0xbd0] sm:$0xff]
  %v457 = vld [vmem:[%s1 + $0xbd8] sm:$0xff]
  %v458 = vld [vmem:[%s1 + $0xbe0] sm:$0xff]
  %v459 = vld [vmem:[%s1 + $0xbe8] sm:$0xff]
  %v460 = vld [vmem:[%s1 + $0xbf0] sm:$0xff]
  %v461 = vld [vmem:[%s1 + $0xbf8] sm:$0xff]
  %v462 = vld [vmem:[%s1 + $0xc00] sm:$0xff]
  %v463 = vld [vmem:[%s1 + $0xc08] sm:$0xff]
  %v464 = vld [vmem:[%s1 + $0xc10] sm:$0xff]
  %v465 = vld [vmem:[%s1 + $0xc18] sm:$0xff]
  %v466 = vld [vmem:[%s1 + $0xc20] sm:$0xff]
  %v467 = vld [vmem:[%s1 + $0xc28] sm:$0xff]
  %v468 = vld [vmem:[%s1 + $0xc30] sm:$0xff]
  %v469 = vld [vmem:[%s1 + $0xc38] sm:$0xff]
  %v470 = vld [vmem:[%s1 + $0xc40] sm:$0xff]
  %v471 = vld [vmem:[%s1 + $0xc48] sm:$0xff]
  %v472 = vld [vmem:[%s1 + $0xc50] sm:$0xff]
  %v473 = vld [vmem:[%s1 + $0xc58] sm:$0xff]
  %v474 = vld [vmem:[%s1 + $0xc60] sm:$0xff]
  %v475 = vld [vmem:[%s1 + $0xc68] sm:$0xff]
  %v476 = vld [vmem:[%s1 + $0xc70] sm:$0xff]
  %v477 = vld [vmem:[%s1 + $0xc78] sm:$0xff]
  %v478 = vld [vmem:[%s1 + $0xc80] sm:$0xff]
  %v479 = vld [vmem:[%s1 + $0xc88] sm:$0xff]
  %v480 = vld [vmem:[%s1 + $0xc90] sm:$0xff]
  %v481 = vld [vmem:[%s1 + $0xc98] sm:$0xff]
  %v482 = vld [vmem:[%s1 + $0xca0] sm:$0xff]
  %v483 = vld [vmem:[%s1 + $0xca8] sm:$0xff]
  %v484 = vld [vmem:[%s1 + $0xcb0] sm:$0xff]
  %v485 = vld [vmem:[%s1 + $0xcb8] sm:$0xff]
  %v486 = vld [vmem:[%s1 + $0xcc0] sm:$0xff]
  %v487 = vld [vmem:[%s1 + $0xcc8] sm:$0xff]
  %v488 = vld [vmem:[%s1 + $0xcd0] sm:$0xff]
  %v489 = vld [vmem:[%s1 + $0xcd8] sm:$0xff]
  %v490 = vld [vmem:[%s1 + $0xce0] sm:$0xff]
  %v491 = vld [vmem:[%s1 + $0xce8] sm:$0xff]
  %v492 = vld [vmem:[%s1 + $0xcf0] sm:$0xff]
  %v493 = vld [vmem:[%s1 + $0xcf8] sm:$0xff]
  %v494 = vld [vmem:[%s1 + $0xd00] sm:$0xff]
  %v495 = vld [vmem:[%s1 + $0xd08] sm:$0xff]
  %v496 = vld [vmem:[%s1 + $0xd10] sm:$0xff]
  %v497 = vld [vmem:[%s1 + $0xd18] sm:$0xff]
  %v498 = vld [vmem:[%s1 + $0xd20] sm:$0xff]
  %v499 = vld [vmem:[%s1 + $0xd28] sm:$0xff]
  %v500 = vld [vmem:[%s1 + $0xd30] sm:$0xff]
  %v501 = vld [vmem:[%s1 + $0xd38] sm:$0xff]
  %v502 = vld [vmem:[%s1 + $0xd40] sm:$0xff]
  %v503 = vld [vmem:[%s1 + $0xd48] sm:$0xff]
  %v504 = vld [vmem:[%s1 + $0xd50] sm:$0xff]
  %v505 = vld [vmem:[%s1 + $0xd58] sm:$0xff]
  %v506 = vld [vmem:[%s1 + $0xd60] sm:$0xff]
  %v507 = vld [vmem:[%s1 + $0xd68] sm:$0xff]
  %v508 = vld [vmem:[%s1 + $0xd70] sm:$0xff]
  %v509 = vld [vmem:[%s1 + $0xd78] sm:$0xff]
  %v510 = vld [vmem:[%s1 + $0xd80] sm:$0xff]
  %v511 = vld [vmem:[%s1 + $0xd88] sm:$0xff]
  %v512 = vld [vmem:[%s1 + $0xd90] sm:$0xff]
  %v513 = vld [vmem:[%s1 + $0xd98] sm:$0xff]
  %v514 = vld [vmem:[%s1 + $0xda0] sm:$0xff]
  %v515 = vld [vmem:[%s1 + $0xda8] sm:$0xff]
  %v516 = vld [vmem:[%s1 + $0xdb0] sm:$0xff]
  %v517 = vld [vmem:[%s1 + $0xdb8] sm:$0xff]
  %v518 = vld [vmem:[%s1 + $0xdc0] sm:$0xff]
  %v519 = vld [vmem:[%s1 + $0xdc8] sm:$0xff]
  %v520 = vld [vmem:[%s1 + $0xdd0] sm:$0xff]
  %v521 = vld [vmem:[%s1 + $0xdd8] sm:$0xff]
  %v522 = vld [vmem:[%s1 + $0xde0] sm:$0xff]
  %v523 = vld [vmem:[%s1 + $0xde8] sm:$0xff]
  %v524 = vld [vmem:[%s1 + $0xdf0] sm:$0xff]
  %v525 = vld [vmem:[%s1 + $0xdf8] sm:$0xff]
  %v526 = vld [vmem:[%s1 + $0xe00] sm:$0xff]
  %v527 = vld [vmem:[%s1 + $0xe08] sm:$0xff]
  %v528 = vld [vmem:[%s1 + $0xe10] sm:$0xff]
  %v529 = vld [vmem:[%s1 + $0xe18] sm:$0xff]
  %v530 = vld [vmem:[%s1 + $0xe20] sm:$0xff]
  %v531 = vld [vmem:[%s1 + $0xe28] sm:$0xff]
  %v532 = vld [vmem:[%s1 + $0xe30] sm:$0xff]
  %v533 = vld [vmem:[%s1 + $0xe38] sm:$0xff]
  %v534 = vld [vmem:[%s1 + $0xe40] sm:$0xff]
  %v535 = vld [vmem:[%s1 + $0xe48] sm:$0xff]
  %v536 = vld [vmem:[%s1 + $0xe50] sm:$0xff]
  %v537 = vld [vmem:[%s1 + $0xe58] sm:$0xff]
  %v538 = vld [vmem:[%s1 + $0xe60] sm:$0xff]
  %v539 = vld [vmem:[%s1 + $0xe68] sm:$0xff]
  %v540 = vld [vmem:[%s1 + $0xe70] sm:$0xff]
  %v541 = vld [vmem:[%s1 + $0xe78] sm:$0xff]
  %v542 = vld [vmem:[%s1 + $0xe80] sm:$0xff]
  %v543 = vld [vmem:[%s1 + $0xe88] sm:$0xff]
  %v544 = vld [vmem:[%s1 + $0xe90] sm:$0xff]
  %v545 = vld [vmem:[%s1 + $0xe98] sm:$0xff]
  %v546 = vld [vmem:[%s1 + $0xea0] sm:$0xff]
  %v547 = vld [vmem:[%s1 + $0xea8] sm:$0xff]
  %v548 = vld [vmem:[%s1 + $0xeb0] sm:$0xff]
  %v549 = vld [vmem:[%s1 + $0xeb8] sm:$0xff]
  %v550 = vld [vmem:[%s1 + $0xec0] sm:$0xff]
  %v551 = vld [vmem:[%s1 + $0xec8] sm:$0xff]
  %v552 = vld [vmem:[%s1 + $0xed0] sm:$0xff]
  %v553 = vld [vmem:[%s1 + $0xed8] sm:$0xff]
  %v554 = vld [vmem:[%s1 + $0xee0] sm:$0xff]
  %v555 = vld [vmem:[%s1 + $0xee8] sm:$0xff]
  %v556 = vld [vmem:[%s1 + $0xef0] sm:$0xff]
  %v557 = vld [vmem:[%s1 + $0xef8] sm:$0xff]
  %v558 = vld [vmem:[%s1 + $0xf00] sm:$0xff]
  %v559 = vld [vmem:[%s1 + $0xf08] sm:$0xff]
  %v560 = vld [vmem:[%s1 + $0xf10] sm:$0xff]
  %v561 = vld [vmem:[%s1 + $0xf18] sm:$0xff]
  %v562 = vld [vmem:[%s1 + $0xf20] sm:$0xff]
  %v563 = vld [vmem:[%s1 + $0xf28] sm:$0xff]
  %v564 = vld [vmem:[%s1 + $0xf30] sm:$0xff]
  %v565 = vld [vmem:[%s1 + $0xf38] sm:$0xff]
  %v566 = vld [vmem:[%s1 + $0xf40] sm:$0xff]
  %v567 = vld [vmem:[%s1 + $0xf48] sm:$0xff]
  %v568 = vld [vmem:[%s1 + $0xf50] sm:$0xff]
  %v569 = vld [vmem:[%s1 + $0xf58] sm:$0xff]
  %v570 = vld [vmem:[%s1 + $0xf60] sm:$0xff]
  %v571 = vld [vmem:[%s1 + $0xf68] sm:$0xff]
  %v572 = vld [vmem:[%s1 + $0xf70] sm:$0xff]
  %v573 = vld [vmem:[%s1 + $0xf78] sm:$0xff]
  %v574 = vld [vmem:[%s1 + $0xf80] sm:$0xff]
  %v575 = vld [vmem:[%s1 + $0xf88] sm:$0xff]
  %v576 = vld [vmem:[%s1 + $0xf90] sm:$0xff]
  %v577 = vld [vmem:[%s1 + $0xf98] sm:$0xff]
  %v578 = vld [vmem:[%s1 + $0xfa0] sm:$0xff]
  %v579 = vld [vmem:[%s1 + $0xfa8] sm:$0xff]
  %v580 = vld [vmem:[%s1 + $0xfb0] sm:$0xff]
  %v581 = vld [vmem:[%s1 + $0xfb8] sm:$0xff]
  %v582 = vld [vmem:[%s1 + $0xfc0] sm:$0xff]
  %v583 = vld [vmem:[%s1 + $0xfc8] sm:$0xff]
  %v584 = vld [vmem:[%s1 + $0xfd0] sm:$0xff]
  %v585 = vld [vmem:[%s1 + $0xfd8] sm:$0xff]
  %v586 = vld [vmem:[%s1 + $0xfe0] sm:$0xff]
  %v587 = vld [vmem:[%s1 + $0xfe8] sm:$0xff]
  %v588 = vld [vmem:[%s1 + $0xff0] sm:$0xff]
  %v589 = vld [vmem:[%s1 + $0xff8] sm:$0xff]
  %v590 = vld [vmem:[%s2] sm:$0x1]
  %v592 = vlaneseq
  %v593 = vshrl.u32 %v592, 7
  %v594 = vsub.s32 0, %v593
  %v595 = vrot.slane %v590, %v594
  %597 = vmatprep.subr.mxu0 0.0
  %598 = vmatpush1.msra.mxu0 %v78
  %599 = vmatprep.subr.mxu0 0.0
  %600 = vmatpush1.msra.mxu0 %v79
  %601 = vmatprep.subr.mxu0 0.0
  %602 = vmatpush1.msra.mxu0 %v80
  %603 = vmatprep.subr.mxu0 0.0
  %604 = vmatpush1.msra.mxu0 %v81
  %605 = vmatprep.subr.mxu0 0.0
  %606 = vmatpush1.msra.mxu0 %v82
  %607 = vmatprep.subr.mxu0 0.0
  %608 = vmatpush1.msra.mxu0 %v83
  %609 = vmatprep.subr.mxu0 0.0
  %610 = vmatpush1.msra.mxu0 %v84
  %611 = vmatprep.subr.mxu0 0.0
  %612 = vmatpush1.msra.mxu0 %v85
  %613 = vmatprep.subr.mxu0 0.0
  %614 = vmatpush1.msra.mxu0 %v86
  %615 = vmatprep.subr.mxu0 0.0
  %616 = vmatpush1.msra.mxu0 %v87
  %617 = vmatprep.subr.mxu0 0.0
  %618 = vmatpush1.msra.mxu0 %v88
  %619 = vmatprep.subr.mxu0 0.0
  %620 = vmatpush1.msra.mxu0 %v89
  %621 = vmatprep.subr.mxu0 0.0
  %622 = vmatpush1.msra.mxu0 %v90
  %623 = vmatprep.subr.mxu0 0.0
  %624 = vmatpush1.msra.mxu0 %v91
  %625 = vmatprep.subr.mxu0 0.0
  %626 = vmatpush1.msra.mxu0 %v92
  %627 = vmatprep.subr.mxu0 0.0
  %628 = vmatpush1.msra.mxu0 %v93
  %629 = vmatprep.subr.mxu0 0.0
  %630 = vmatpush1.msra.mxu0 %v94
  %631 = vmatprep.subr.mxu0 0.0
  %632 = vmatpush1.msra.mxu0 %v95
  %633 = vmatprep.subr.mxu0 0.0
  %634 = vmatpush1.msra.mxu0 %v96
  %635 = vmatprep.subr.mxu0 0.0
  %636 = vmatpush1.msra.mxu0 %v97
  %637 = vmatprep.subr.mxu0 0.0
  %638 = vmatpush1.msra.mxu0 %v98
  %639 = vmatprep.subr.mxu0 0.0
  %640 = vmatpush1.msra.mxu0 %v99
  %641 = vmatprep.subr.mxu0 0.0
  %642 = vmatpush1.msra.mxu0 %v100
  %643 = vmatprep.subr.mxu0 0.0
  %644 = vmatpush1.msra.mxu0 %v101
  %645 = vmatprep.subr.mxu0 0.0
  %646 = vmatpush1.msra.mxu0 %v102
  %647 = vmatprep.subr.mxu0 0.0
  %648 = vmatpush1.msra.mxu0 %v103
  %649 = vmatprep.subr.mxu0 0.0
  %650 = vmatpush1.msra.mxu0 %v104
  %651 = vmatprep.subr.mxu0 0.0
  %652 = vmatpush1.msra.mxu0 %v105
  %653 = vmatprep.subr.mxu0 0.0
  %654 = vmatpush1.msra.mxu0 %v106
  %655 = vmatprep.subr.mxu0 0.0
  %656 = vmatpush1.msra.mxu0 %v107
  %657 = vmatprep.subr.mxu0 0.0
  %658 = vmatpush1.msra.mxu0 %v108
  %659 = vmatprep.subr.mxu0 0.0
  %660 = vmatpush1.msra.mxu0 %v109
  %661 = vmatprep.mubr.f32.mxu0 %v15
  %662 = vmatmul.mubr.f32.gmra.mrb[0].mxu0 %v14
  %v663 = vpop.f32.mrb[0].mxu0
  %v664 = vadd.f32 %v595, %v663
  %v665 = vpop.f32.mrb[0].mxu0
  %666 = vmatprep.mubr.f32.mxu0 %v47
  %667 = vmatmul.mubr.f32.gmra.mrb[0].mxu0 %v46
  %v668 = vpop.f32.mrb[0].mxu0
  %v669 = vadd.f32 %v595, %v668
  %v670 = vpop.f32.mrb[0].mxu0
  %671 = vdwg.mxu0
  %672 = vmatprep.subr.mxu0 0.0
  %673 = vmatpush1.msra.mxu0 %v110
  %674 = vmatprep.subr.mxu0 0.0
  %675 = vmatpush1.msra.mxu0 %v111
  %676 = vmatprep.subr.mxu0 0.0
  %677 = vmatpush1.msra.mxu0 %v112
  %678 = vmatprep.subr.mxu0 0.0
  %679 = vmatpush1.msra.mxu0 %v113
  %680 = vmatprep.subr.mxu0 0.0
  %681 = vmatpush1.msra.mxu0 %v114
  %682 = vmatprep.subr.mxu0 0.0
  %683 = vmatpush1.msra.mxu0 %v115
  %684 = vmatprep.subr.mxu0 0.0
  %685 = vmatpush1.msra.mxu0 %v116
  %686 = vmatprep.subr.mxu0 0.0
  %687 = vmatpush1.msra.mxu0 %v117
  %688 = vmatprep.subr.mxu0 0.0
  %689 = vmatpush1.msra.mxu0 %v118
  %690 = vmatprep.subr.mxu0 0.0
  %691 = vmatpush1.msra.mxu0 %v119
  %692 = vmatprep.subr.mxu0 0.0
  %693 = vmatpush1.msra.mxu0 %v120
  %694 = vmatprep.subr.mxu0 0.0
  %695 = vmatpush1.msra.mxu0 %v121
  %696 = vmatprep.subr.mxu0 0.0
  %697 = vmatpush1.msra.mxu0 %v122
  %698 = vmatprep.subr.mxu0 0.0
  %699 = vmatpush1.msra.mxu0 %v123
  %700 = vmatprep.subr.mxu0 0.0
  %701 = vmatpush1.msra.mxu0 %v124
  %702 = vmatprep.subr.mxu0 0.0
  %703 = vmatpush1.msra.mxu0 %v125
  %704 = vmatprep.subr.mxu0 0.0
  %705 = vmatpush1.msra.mxu0 %v126
  %706 = vmatprep.subr.mxu0 0.0
  %707 = vmatpush1.msra.mxu0 %v127
  %708 = vmatprep.subr.mxu0 0.0
  %709 = vmatpush1.msra.mxu0 %v128
  %710 = vmatprep.subr.mxu0 0.0
  %711 = vmatpush1.msra.mxu0 %v129
  %712 = vmatprep.subr.mxu0 0.0
  %713 = vmatpush1.msra.mxu0 %v130
  %714 = vmatprep.subr.mxu0 0.0
  %715 = vmatpush1.msra.mxu0 %v131
  %716 = vmatprep.subr.mxu0 0.0
  %717 = vmatpush1.msra.mxu0 %v132
  %718 = vmatprep.subr.mxu0 0.0
  %719 = vmatpush1.msra.mxu0 %v133
  %720 = vmatprep.subr.mxu0 0.0
  %721 = vmatpush1.msra.mxu0 %v134
  %722 = vmatprep.subr.mxu0 0.0
  %723 = vmatpush1.msra.mxu0 %v135
  %724 = vmatprep.subr.mxu0 0.0
  %725 = vmatpush1.msra.mxu0 %v136
  %726 = vmatprep.subr.mxu0 0.0
  %727 = vmatpush1.msra.mxu0 %v137
  %728 = vmatprep.subr.mxu0 0.0
  %729 = vmatpush1.msra.mxu0 %v138
  %730 = vmatprep.subr.mxu0 0.0
  %731 = vmatpush1.msra.mxu0 %v139
  %732 = vmatprep.subr.mxu0 0.0
  %733 = vmatpush1.msra.mxu0 %v140
  %734 = vmatprep.subr.mxu0 0.0
  %735 = vmatpush1.msra.mxu0 %v141
  %736 = vmatprep.mubr.f32.mxu0 %v17
  %737 = vmatmul.mubr.f32.gmra.mrb[0].mxu0 %v16
  %v738 = vpop.f32.mrb[0].mxu0
  %v739 = vadd.f32 %v664, %v738
  %v740 = vpop.f32.mrb[0].mxu0
  %741 = vmatprep.mubr.f32.mxu0 %v49
  %742 = vmatmul.mubr.f32.gmra.mrb[0].mxu0 %v48
  %v743 = vpop.f32.mrb[0].mxu0
  %v744 = vadd.f32 %v669, %v743
  %v745 = vpop.f32.mrb[0].mxu0
  %746 = vdwg.mxu0
  %747 = vmatprep.subr.mxu0 0.0
  %748 = vmatpush1.msra.mxu0 %v142
  %749 = vmatprep.subr.mxu0 0.0
  %750 = vmatpush1.msra.mxu0 %v143
  %751 = vmatprep.subr.mxu0 0.0
  %752 = vmatpush1.msra.mxu0 %v144
  %753 = vmatprep.subr.mxu0 0.0
  %754 = vmatpush1.msra.mxu0 %v145
  %755 = vmatprep.subr.mxu0 0.0
  %756 = vmatpush1.msra.mxu0 %v146
  %757 = vmatprep.subr.mxu0 0.0
  %758 = vmatpush1.msra.mxu0 %v147
  %759 = vmatprep.subr.mxu0 0.0
  %760 = vmatpush1.msra.mxu0 %v148
  %761 = vmatprep.subr.mxu0 0.0
  %762 = vmatpush1.msra.mxu0 %v149
  %763 = vmatprep.subr.mxu0 0.0
  %764 = vmatpush1.msra.mxu0 %v150
  %765 = vmatprep.subr.mxu0 0.0
  %766 = vmatpush1.msra.mxu0 %v151
  %767 = vmatprep.subr.mxu0 0.0
  %768 = vmatpush1.msra.mxu0 %v152
  %769 = vmatprep.subr.mxu0 0.0
  %770 = vmatpush1.msra.mxu0 %v153
  %771 = vmatprep.subr.mxu0 0.0
  %772 = vmatpush1.msra.mxu0 %v154
  %773 = vmatprep.subr.mxu0 0.0
  %774 = vmatpush1.msra.mxu0 %v155
  %775 = vmatprep.subr.mxu0 0.0
  %776 = vmatpush1.msra.mxu0 %v156
  %777 = vmatprep.subr.mxu0 0.0
  %778 = vmatpush1.msra.mxu0 %v157
  %779 = vmatprep.subr.mxu0 0.0
  %780 = vmatpush1.msra.mxu0 %v158
  %781 = vmatprep.subr.mxu0 0.0
  %782 = vmatpush1.msra.mxu0 %v159
  %783 = vmatprep.subr.mxu0 0.0
  %784 = vmatpush1.msra.mxu0 %v160
  %785 = vmatprep.subr.mxu0 0.0
  %786 = vmatpush1.msra.mxu0 %v161
  %787 = vmatprep.subr.mxu0 0.0
  %788 = vmatpush1.msra.mxu0 %v162
  %789 = vmatprep.subr.mxu0 0.0
  %790 = vmatpush1.msra.mxu0 %v163
  %791 = vmatprep.subr.mxu0 0.0
  %792 = vmatpush1.msra.mxu0 %v164
  %793 = vmatprep.subr.mxu0 0.0
  %794 = vmatpush1.msra.mxu0 %v165
  %795 = vmatprep.subr.mxu0 0.0
  %796 = vmatpush1.msra.mxu0 %v166
  %797 = vmatprep.subr.mxu0 0.0
  %798 = vmatpush1.msra.mxu0 %v167
  %799 = vmatprep.subr.mxu0 0.0
  %800 = vmatpush1.msra.mxu0 %v168
  %801 = vmatprep.subr.mxu0 0.0
  %802 = vmatpush1.msra.mxu0 %v169
  %803 = vmatprep.subr.mxu0 0.0
  %804 = vmatpush1.msra.mxu0 %v170
  %805 = vmatprep.subr.mxu0 0.0
  %806 = vmatpush1.msra.mxu0 %v171
  %807 = vmatprep.subr.mxu0 0.0
  %808 = vmatpush1.msra.mxu0 %v172
  %809 = vmatprep.subr.mxu0 0.0
  %810 = vmatpush1.msra.mxu0 %v173
  %811 = vmatprep.mubr.f32.mxu0 %v19
  %812 = vmatmul.mubr.f32.gmra.mrb[0].mxu0 %v18
  %v813 = vpop.f32.mrb[0].mxu0
  %v814 = vadd.f32 %v739, %v813
  %v815 = vpop.f32.mrb[0].mxu0
  %816 = vmatprep.mubr.f32.mxu0 %v51
  %817 = vmatmul.mubr.f32.gmra.mrb[0].mxu0 %v50
  %v818 = vpop.f32.mrb[0].mxu0
  %v819 = vadd.f32 %v744, %v818
  %v820 = vpop.f32.mrb[0].mxu0
  %821 = vdwg.mxu0
  %822 = vmatprep.subr.mxu0 0.0
  %823 = vmatpush1.msra.mxu0 %v174
  %824 = vmatprep.subr.mxu0 0.0
  %825 = vmatpush1.msra.mxu0 %v175
  %826 = vmatprep.subr.mxu0 0.0
  %827 = vmatpush1.msra.mxu0 %v176
  %828 = vmatprep.subr.mxu0 0.0
  %829 = vmatpush1.msra.mxu0 %v177
  %830 = vmatprep.subr.mxu0 0.0
  %831 = vmatpush1.msra.mxu0 %v178
  %832 = vmatprep.subr.mxu0 0.0
  %833 = vmatpush1.msra.mxu0 %v179
  %834 = vmatprep.subr.mxu0 0.0
  %835 = vmatpush1.msra.mxu0 %v180
  %836 = vmatprep.subr.mxu0 0.0
  %837 = vmatpush1.msra.mxu0 %v181
  %838 = vmatprep.subr.mxu0 0.0
  %839 = vmatpush1.msra.mxu0 %v182
  %840 = vmatprep.subr.mxu0 0.0
  %841 = vmatpush1.msra.mxu0 %v183
  %842 = vmatprep.subr.mxu0 0.0
  %843 = vmatpush1.msra.mxu0 %v184
  %844 = vmatprep.subr.mxu0 0.0
  %845 = vmatpush1.msra.mxu0 %v185
  %846 = vmatprep.subr.mxu0 0.0
  %847 = vmatpush1.msra.mxu0 %v186
  %848 = vmatprep.subr.mxu0 0.0
  %849 = vmatpush1.msra.mxu0 %v187
  %850 = vmatprep.subr.mxu0 0.0
  %851 = vmatpush1.msra.mxu0 %v188
  %852 = vmatprep.subr.mxu0 0.0
  %853 = vmatpush1.msra.mxu0 %v189
  %854 = vmatprep.subr.mxu0 0.0
  %855 = vmatpush1.msra.mxu0 %v190
  %856 = vmatprep.subr.mxu0 0.0
  %857 = vmatpush1.msra.mxu0 %v191
  %858 = vmatprep.subr.mxu0 0.0
  %859 = vmatpush1.msra.mxu0 %v192
  %860 = vmatprep.subr.mxu0 0.0
  %861 = vmatpush1.msra.mxu0 %v193
  %862 = vmatprep.subr.mxu0 0.0
  %863 = vmatpush1.msra.mxu0 %v194
  %864 = vmatprep.subr.mxu0 0.0
  %865 = vmatpush1.msra.mxu0 %v195
  %866 = vmatprep.subr.mxu0 0.0
  %867 = vmatpush1.msra.mxu0 %v196
  %868 = vmatprep.subr.mxu0 0.0
  %869 = vmatpush1.msra.mxu0 %v197
  %870 = vmatprep.subr.mxu0 0.0
  %871 = vmatpush1.msra.mxu0 %v198
  %872 = vmatprep.subr.mxu0 0.0
  %873 = vmatpush1.msra.mxu0 %v199
  %874 = vmatprep.subr.mxu0 0.0
  %875 = vmatpush1.msra.mxu0 %v200
  %876 = vmatprep.subr.mxu0 0.0
  %877 = vmatpush1.msra.mxu0 %v201
  %878 = vmatprep.subr.mxu0 0.0
  %879 = vmatpush1.msra.mxu0 %v202
  %880 = vmatprep.subr.mxu0 0.0
  %881 = vmatpush1.msra.mxu0 %v203
  %882 = vmatprep.subr.mxu0 0.0
  %883 = vmatpush1.msra.mxu0 %v204
  %884 = vmatprep.subr.mxu0 0.0
  %885 = vmatpush1.msra.mxu0 %v205
  %886 = vmatprep.mubr.f32.mxu0 %v21
  %887 = vmatmul.mubr.f32.gmra.mrb[0].mxu0 %v20
  %v888 = vpop.f32.mrb[0].mxu0
  %v889 = vadd.f32 %v814, %v888
  %v890 = vpop.f32.mrb[0].mxu0
  %891 = vmatprep.mubr.f32.mxu0 %v53
  %892 = vmatmul.mubr.f32.gmra.mrb[0].mxu0 %v52
  %v893 = vpop.f32.mrb[0].mxu0
  %v894 = vadd.f32 %v819, %v893
  %v895 = vpop.f32.mrb[0].mxu0
  %896 = vdwg.mxu0
  %897 = vmatprep.subr.mxu0 0.0
  %898 = vmatpush1.msra.mxu0 %v206
  %899 = vmatprep.subr.mxu0 0.0
  %900 = vmatpush1.msra.mxu0 %v207
  %901 = vmatprep.subr.mxu0 0.0
  %902 = vmatpush1.msra.mxu0 %v208
  %903 = vmatprep.subr.mxu0 0.0
  %904 = vmatpush1.msra.mxu0 %v209
  %905 = vmatprep.subr.mxu0 0.0
  %906 = vmatpush1.msra.mxu0 %v210
  %907 = vmatprep.subr.mxu0 0.0
  %908 = vmatpush1.msra.mxu0 %v211
  %909 = vmatprep.subr.mxu0 0.0
  %910 = vmatpush1.msra.mxu0 %v212
  %911 = vmatprep.subr.mxu0 0.0
  %912 = vmatpush1.msra.mxu0 %v213
  %913 = vmatprep.subr.mxu0 0.0
  %914 = vmatpush1.msra.mxu0 %v214
  %915 = vmatprep.subr.mxu0 0.0
  %916 = vmatpush1.msra.mxu0 %v215
  %917 = vmatprep.subr.mxu0 0.0
  %918 = vmatpush1.msra.mxu0 %v216
  %919 = vmatprep.subr.mxu0 0.0
  %920 = vmatpush1.msra.mxu0 %v217
  %921 = vmatprep.subr.mxu0 0.0
  %922 = vmatpush1.msra.mxu0 %v218
  %923 = vmatprep.subr.mxu0 0.0
  %924 = vmatpush1.msra.mxu0 %v219
  %925 = vmatprep.subr.mxu0 0.0
  %926 = vmatpush1.msra.mxu0 %v220
  %927 = vmatprep.subr.mxu0 0.0
  %928 = vmatpush1.msra.mxu0 %v221
  %929 = vmatprep.subr.mxu0 0.0
  %930 = vmatpush1.msra.mxu0 %v222
  %931 = vmatprep.subr.mxu0 0.0
  %932 = vmatpush1.msra.mxu0 %v223
  %933 = vmatprep.subr.mxu0 0.0
  %934 = vmatpush1.msra.mxu0 %v224
  %935 = vmatprep.subr.mxu0 0.0
  %936 = vmatpush1.msra.mxu0 %v225
  %937 = vmatprep.subr.mxu0 0.0
  %938 = vmatpush1.msra.mxu0 %v226
  %939 = vmatprep.subr.mxu0 0.0
  %940 = vmatpush1.msra.mxu0 %v227
  %941 = vmatprep.subr.mxu0 0.0
  %942 = vmatpush1.msra.mxu0 %v228
  %943 = vmatprep.subr.mxu0 0.0
  %944 = vmatpush1.msra.mxu0 %v229
  %945 = vmatprep.subr.mxu0 0.0
  %946 = vmatpush1.msra.mxu0 %v230
  %947 = vmatprep.subr.mxu0 0.0
  %948 = vmatpush1.msra.mxu0 %v231
  %949 = vmatprep.subr.mxu0 0.0
  %950 = vmatpush1.msra.mxu0 %v232
  %951 = vmatprep.subr.mxu0 0.0
  %952 = vmatpush1.msra.mxu0 %v233
  %953 = vmatprep.subr.mxu0 0.0
  %954 = vmatpush1.msra.mxu0 %v234
  %955 = vmatprep.subr.mxu0 0.0
  %956 = vmatpush1.msra.mxu0 %v235
  %957 = vmatprep.subr.mxu0 0.0
  %958 = vmatpush1.msra.mxu0 %v236
  %959 = vmatprep.subr.mxu0 0.0
  %960 = vmatpush1.msra.mxu0 %v237
  %961 = vmatprep.mubr.f32.mxu0 %v23
  %962 = vmatmul.mubr.f32.gmra.mrb[0].mxu0 %v22
  %v963 = vpop.f32.mrb[0].mxu0
  %v964 = vadd.f32 %v889, %v963
  %v965 = vpop.f32.mrb[0].mxu0
  %966 = vmatprep.mubr.f32.mxu0 %v55
  %967 = vmatmul.mubr.f32.gmra.mrb[0].mxu0 %v54
  %v968 = vpop.f32.mrb[0].mxu0
  %v969 = vadd.f32 %v894, %v968
  %v970 = vpop.f32.mrb[0].mxu0
  %971 = vdwg.mxu0
  %972 = vmatprep.subr.mxu0 0.0
  %973 = vmatpush1.msra.mxu0 %v238
  %974 = vmatprep.subr.mxu0 0.0
  %975 = vmatpush1.msra.mxu0 %v239
  %976 = vmatprep.subr.mxu0 0.0
  %977 = vmatpush1.msra.mxu0 %v240
  %978 = vmatprep.subr.mxu0 0.0
  %979 = vmatpush1.msra.mxu0 %v241
  %980 = vmatprep.subr.mxu0 0.0
  %981 = vmatpush1.msra.mxu0 %v242
  %982 = vmatprep.subr.mxu0 0.0
  %983 = vmatpush1.msra.mxu0 %v243
  %984 = vmatprep.subr.mxu0 0.0
  %985 = vmatpush1.msra.mxu0 %v244
  %986 = vmatprep.subr.mxu0 0.0
  %987 = vmatpush1.msra.mxu0 %v245
  %988 = vmatprep.subr.mxu0 0.0
  %989 = vmatpush1.msra.mxu0 %v246
  %990 = vmatprep.subr.mxu0 0.0
  %991 = vmatpush1.msra.mxu0 %v247
  %992 = vmatprep.subr.mxu0 0.0
  %993 = vmatpush1.msra.mxu0 %v248
  %994 = vmatprep.subr.mxu0 0.0
  %995 = vmatpush1.msra.mxu0 %v249
  %996 = vmatprep.subr.mxu0 0.0
  %997 = vmatpush1.msra.mxu0 %v250
  %998 = vmatprep.subr.mxu0 0.0
  %999 = vmatpush1.msra.mxu0 %v251
  %1000 = vmatprep.subr.mxu0 0.0
  %1001 = vmatpush1.msra.mxu0 %v252
  %1002 = vmatprep.subr.mxu0 0.0
  %1003 = vmatpush1.msra.mxu0 %v253
  %1004 = vmatprep.subr.mxu0 0.0
  %1005 = vmatpush1.msra.mxu0 %v254
  %1006 = vmatprep.subr.mxu0 0.0
  %1007 = vmatpush1.msra.mxu0 %v255
  %1008 = vmatprep.subr.mxu0 0.0
  %1009 = vmatpush1.msra.mxu0 %v256
  %1010 = vmatprep.subr.mxu0 0.0
  %1011 = vmatpush1.msra.mxu0 %v257
  %1012 = vmatprep.subr.mxu0 0.0
  %1013 = vmatpush1.msra.mxu0 %v258
  %1014 = vmatprep.subr.mxu0 0.0
  %1015 = vmatpush1.msra.mxu0 %v259
  %1016 = vmatprep.subr.mxu0 0.0
  %1017 = vmatpush1.msra.mxu0 %v260
  %1018 = vmatprep.subr.mxu0 0.0
  %1019 = vmatpush1.msra.mxu0 %v261
  %1020 = vmatprep.subr.mxu0 0.0
  %1021 = vmatpush1.msra.mxu0 %v262
  %1022 = vmatprep.subr.mxu0 0.0
  %1023 = vmatpush1.msra.mxu0 %v263
  %1024 = vmatprep.subr.mxu0 0.0
  %1025 = vmatpush1.msra.mxu0 %v264
  %1026 = vmatprep.subr.mxu0 0.0
  %1027 = vmatpush1.msra.mxu0 %v265
  %1028 = vmatprep.subr.mxu0 0.0
  %1029 = vmatpush1.msra.mxu0 %v266
  %1030 = vmatprep.subr.mxu0 0.0
  %1031 = vmatpush1.msra.mxu0 %v267
  %1032 = vmatprep.subr.mxu0 0.0
  %1033 = vmatpush1.msra.mxu0 %v268
  %1034 = vmatprep.subr.mxu0 0.0
  %1035 = vmatpush1.msra.mxu0 %v269
  %1036 = vmatprep.mubr.f32.mxu0 %v25
  %1037 = vmatmul.mubr.f32.gmra.mrb[0].mxu0 %v24
  %v1038 = vpop.f32.mrb[0].mxu0
  %v1039 = vadd.f32 %v964, %v1038
  %v1040 = vpop.f32.mrb[0].mxu0
  %1041 = vmatprep.mubr.f32.mxu0 %v57
  %1042 = vmatmul.mubr.f32.gmra.mrb[0].mxu0 %v56
  %v1043 = vpop.f32.mrb[0].mxu0
  %v1044 = vadd.f32 %v969, %v1043
  %v1045 = vpop.f32.mrb[0].mxu0
  %1046 = vdwg.mxu0
  %1047 = vmatprep.subr.mxu0 0.0
  %1048 = vmatpush1.msra.mxu0 %v270
  %1049 = vmatprep.subr.mxu0 0.0
  %1050 = vmatpush1.msra.mxu0 %v271
  %1051 = vmatprep.subr.mxu0 0.0
  %1052 = vmatpush1.msra.mxu0 %v272
  %1053 = vmatprep.subr.mxu0 0.0
  %1054 = vmatpush1.msra.mxu0 %v273
  %1055 = vmatprep.subr.mxu0 0.0
  %1056 = vmatpush1.msra.mxu0 %v274
  %1057 = vmatprep.subr.mxu0 0.0
  %1058 = vmatpush1.msra.mxu0 %v275
  %1059 = vmatprep.subr.mxu0 0.0
  %1060 = vmatpush1.msra.mxu0 %v276
  %1061 = vmatprep.subr.mxu0 0.0
  %1062 = vmatpush1.msra.mxu0 %v277
  %1063 = vmatprep.subr.mxu0 0.0
  %1064 = vmatpush1.msra.mxu0 %v278
  %1065 = vmatprep.subr.mxu0 0.0
  %1066 = vmatpush1.msra.mxu0 %v279
  %1067 = vmatprep.subr.mxu0 0.0
  %1068 = vmatpush1.msra.mxu0 %v280
  %1069 = vmatprep.subr.mxu0 0.0
  %1070 = vmatpush1.msra.mxu0 %v281
  %1071 = vmatprep.subr.mxu0 0.0
  %1072 = vmatpush1.msra.mxu0 %v282
  %1073 = vmatprep.subr.mxu0 0.0
  %1074 = vmatpush1.msra.mxu0 %v283
  %1075 = vmatprep.subr.mxu0 0.0
  %1076 = vmatpush1.msra.mxu0 %v284
  %1077 = vmatprep.subr.mxu0 0.0
  %1078 = vmatpush1.msra.mxu0 %v285
  %1079 = vmatprep.subr.mxu0 0.0
  %1080 = vmatpush1.msra.mxu0 %v286
  %1081 = vmatprep.subr.mxu0 0.0
  %1082 = vmatpush1.msra.mxu0 %v287
  %1083 = vmatprep.subr.mxu0 0.0
  %1084 = vmatpush1.msra.mxu0 %v288
  %1085 = vmatprep.subr.mxu0 0.0
  %1086 = vmatpush1.msra.mxu0 %v289
  %1087 = vmatprep.subr.mxu0 0.0
  %1088 = vmatpush1.msra.mxu0 %v290
  %1089 = vmatprep.subr.mxu0 0.0
  %1090 = vmatpush1.msra.mxu0 %v291
  %1091 = vmatprep.subr.mxu0 0.0
  %1092 = vmatpush1.msra.mxu0 %v292
  %1093 = vmatprep.subr.mxu0 0.0
  %1094 = vmatpush1.msra.mxu0 %v293
  %1095 = vmatprep.subr.mxu0 0.0
  %1096 = vmatpush1.msra.mxu0 %v294
  %1097 = vmatprep.subr.mxu0 0.0
  %1098 = vmatpush1.msra.mxu0 %v295
  %1099 = vmatprep.subr.mxu0 0.0
  %1100 = vmatpush1.msra.mxu0 %v296
  %1101 = vmatprep.subr.mxu0 0.0
  %1102 = vmatpush1.msra.mxu0 %v297
  %1103 = vmatprep.subr.mxu0 0.0
  %1104 = vmatpush1.msra.mxu0 %v298
  %1105 = vmatprep.subr.mxu0 0.0
  %1106 = vmatpush1.msra.mxu0 %v299
  %1107 = vmatprep.subr.mxu0 0.0
  %1108 = vmatpush1.msra.mxu0 %v300
  %1109 = vmatprep.subr.mxu0 0.0
  %1110 = vmatpush1.msra.mxu0 %v301
  %1111 = vmatprep.mubr.f32.mxu0 %v27
  %1112 = vmatmul.mubr.f32.gmra.mrb[0].mxu0 %v26
  %v1113 = vpop.f32.mrb[0].mxu0
  %v1114 = vadd.f32 %v1039, %v1113
  %v1115 = vpop.f32.mrb[0].mxu0
  %1116 = vmatprep.mubr.f32.mxu0 %v59
  %1117 = vmatmul.mubr.f32.gmra.mrb[0].mxu0 %v58
  %v1118 = vpop.f32.mrb[0].mxu0
  %v1119 = vadd.f32 %v1044, %v1118
  %v1120 = vpop.f32.mrb[0].mxu0
  %1121 = vdwg.mxu0
  %1122 = vmatprep.subr.mxu0 0.0
  %1123 = vmatpush1.msra.mxu0 %v302
  %1124 = vmatprep.subr.mxu0 0.0
  %1125 = vmatpush1.msra.mxu0 %v303
  %1126 = vmatprep.subr.mxu0 0.0
  %1127 = vmatpush1.msra.mxu0 %v304
  %1128 = vmatprep.subr.mxu0 0.0
  %1129 = vmatpush1.msra.mxu0 %v305
  %1130 = vmatprep.subr.mxu0 0.0
  %1131 = vmatpush1.msra.mxu0 %v306
  %1132 = vmatprep.subr.mxu0 0.0
  %1133 = vmatpush1.msra.mxu0 %v307
  %1134 = vmatprep.subr.mxu0 0.0
  %1135 = vmatpush1.msra.mxu0 %v308
  %1136 = vmatprep.subr.mxu0 0.0
  %1137 = vmatpush1.msra.mxu0 %v309
  %1138 = vmatprep.subr.mxu0 0.0
  %1139 = vmatpush1.msra.mxu0 %v310
  %1140 = vmatprep.subr.mxu0 0.0
  %1141 = vmatpush1.msra.mxu0 %v311
  %1142 = vmatprep.subr.mxu0 0.0
  %1143 = vmatpush1.msra.mxu0 %v312
  %1144 = vmatprep.subr.mxu0 0.0
  %1145 = vmatpush1.msra.mxu0 %v313
  %1146 = vmatprep.subr.mxu0 0.0
  %1147 = vmatpush1.msra.mxu0 %v314
  %1148 = vmatprep.subr.mxu0 0.0
  %1149 = vmatpush1.msra.mxu0 %v315
  %1150 = vmatprep.subr.mxu0 0.0
  %1151 = vmatpush1.msra.mxu0 %v316
  %1152 = vmatprep.subr.mxu0 0.0
  %1153 = vmatpush1.msra.mxu0 %v317
  %1154 = vmatprep.subr.mxu0 0.0
  %1155 = vmatpush1.msra.mxu0 %v318
  %1156 = vmatprep.subr.mxu0 0.0
  %1157 = vmatpush1.msra.mxu0 %v319
  %1158 = vmatprep.subr.mxu0 0.0
  %1159 = vmatpush1.msra.mxu0 %v320
  %1160 = vmatprep.subr.mxu0 0.0
  %1161 = vmatpush1.msra.mxu0 %v321
  %1162 = vmatprep.subr.mxu0 0.0
  %1163 = vmatpush1.msra.mxu0 %v322
  %1164 = vmatprep.subr.mxu0 0.0
  %1165 = vmatpush1.msra.mxu0 %v323
  %1166 = vmatprep.subr.mxu0 0.0
  %1167 = vmatpush1.msra.mxu0 %v324
  %1168 = vmatprep.subr.mxu0 0.0
  %1169 = vmatpush1.msra.mxu0 %v325
  %1170 = vmatprep.subr.mxu0 0.0
  %1171 = vmatpush1.msra.mxu0 %v326
  %1172 = vmatprep.subr.mxu0 0.0
  %1173 = vmatpush1.msra.mxu0 %v327
  %1174 = vmatprep.subr.mxu0 0.0
  %1175 = vmatpush1.msra.mxu0 %v328
  %1176 = vmatprep.subr.mxu0 0.0
  %1177 = vmatpush1.msra.mxu0 %v329
  %1178 = vmatprep.subr.mxu0 0.0
  %1179 = vmatpush1.msra.mxu0 %v330
  %1180 = vmatprep.subr.mxu0 0.0
  %1181 = vmatpush1.msra.mxu0 %v331
  %1182 = vmatprep.subr.mxu0 0.0
  %1183 = vmatpush1.msra.mxu0 %v332
  %1184 = vmatprep.subr.mxu0 0.0
  %1185 = vmatpush1.msra.mxu0 %v333
  %1186 = vmatprep.mubr.f32.mxu0 %v29
  %1187 = vmatmul.mubr.f32.gmra.mrb[0].mxu0 %v28
  %v1188 = vpop.f32.mrb[0].mxu0
  %v1189 = vadd.f32 %v1114, %v1188
  %v1190 = vpop.f32.mrb[0].mxu0
  %1191 = vmatprep.mubr.f32.mxu0 %v61
  %1192 = vmatmul.mubr.f32.gmra.mrb[0].mxu0 %v60
  %v1193 = vpop.f32.mrb[0].mxu0
  %v1194 = vadd.f32 %v1119, %v1193
  %v1195 = vpop.f32.mrb[0].mxu0
  %1196 = vdwg.mxu0
  %1197 = vmatprep.subr.mxu0 0.0
  %1198 = vmatpush1.msra.mxu0 %v334
  %1199 = vmatprep.subr.mxu0 0.0
  %1200 = vmatpush1.msra.mxu0 %v335
  %1201 = vmatprep.subr.mxu0 0.0
  %1202 = vmatpush1.msra.mxu0 %v336
  %1203 = vmatprep.subr.mxu0 0.0
  %1204 = vmatpush1.msra.mxu0 %v337
  %1205 = vmatprep.subr.mxu0 0.0
  %1206 = vmatpush1.msra.mxu0 %v338
  %1207 = vmatprep.subr.mxu0 0.0
  %1208 = vmatpush1.msra.mxu0 %v339
  %1209 = vmatprep.subr.mxu0 0.0
  %1210 = vmatpush1.msra.mxu0 %v340
  %1211 = vmatprep.subr.mxu0 0.0
  %1212 = vmatpush1.msra.mxu0 %v341
  %1213 = vmatprep.subr.mxu0 0.0
  %1214 = vmatpush1.msra.mxu0 %v342
  %1215 = vmatprep.subr.mxu0 0.0
  %1216 = vmatpush1.msra.mxu0 %v343
  %1217 = vmatprep.subr.mxu0 0.0
  %1218 = vmatpush1.msra.mxu0 %v344
  %1219 = vmatprep.subr.mxu0 0.0
  %1220 = vmatpush1.msra.mxu0 %v345
  %1221 = vmatprep.subr.mxu0 0.0
  %1222 = vmatpush1.msra.mxu0 %v346
  %1223 = vmatprep.subr.mxu0 0.0
  %1224 = vmatpush1.msra.mxu0 %v347
  %1225 = vmatprep.subr.mxu0 0.0
  %1226 = vmatpush1.msra.mxu0 %v348
  %1227 = vmatprep.subr.mxu0 0.0
  %1228 = vmatpush1.msra.mxu0 %v349
  %1229 = vmatprep.subr.mxu0 0.0
  %1230 = vmatpush1.msra.mxu0 %v350
  %1231 = vmatprep.subr.mxu0 0.0
  %1232 = vmatpush1.msra.mxu0 %v351
  %1233 = vmatprep.subr.mxu0 0.0
  %1234 = vmatpush1.msra.mxu0 %v352
  %1235 = vmatprep.subr.mxu0 0.0
  %1236 = vmatpush1.msra.mxu0 %v353
  %1237 = vmatprep.subr.mxu0 0.0
  %1238 = vmatpush1.msra.mxu0 %v354
  %1239 = vmatprep.subr.mxu0 0.0
  %1240 = vmatpush1.msra.mxu0 %v355
  %1241 = vmatprep.subr.mxu0 0.0
  %1242 = vmatpush1.msra.mxu0 %v356
  %1243 = vmatprep.subr.mxu0 0.0
  %1244 = vmatpush1.msra.mxu0 %v357
  %1245 = vmatprep.subr.mxu0 0.0
  %1246 = vmatpush1.msra.mxu0 %v358
  %1247 = vmatprep.subr.mxu0 0.0
  %1248 = vmatpush1.msra.mxu0 %v359
  %1249 = vmatprep.subr.mxu0 0.0
  %1250 = vmatpush1.msra.mxu0 %v360
  %1251 = vmatprep.subr.mxu0 0.0
  %1252 = vmatpush1.msra.mxu0 %v361
  %1253 = vmatprep.subr.mxu0 0.0
  %1254 = vmatpush1.msra.mxu0 %v362
  %1255 = vmatprep.subr.mxu0 0.0
  %1256 = vmatpush1.msra.mxu0 %v363
  %1257 = vmatprep.subr.mxu0 0.0
  %1258 = vmatpush1.msra.mxu0 %v364
  %1259 = vmatprep.subr.mxu0 0.0
  %1260 = vmatpush1.msra.mxu0 %v365
  %1261 = vmatprep.mubr.f32.mxu0 %v31
  %1262 = vmatmul.mubr.f32.gmra.mrb[0].mxu0 %v30
  %v1263 = vpop.f32.mrb[0].mxu0
  %v1264 = vadd.f32 %v1189, %v1263
  %v1265 = vpop.f32.mrb[0].mxu0
  %1266 = vmatprep.mubr.f32.mxu0 %v63
  %1267 = vmatmul.mubr.f32.gmra.mrb[0].mxu0 %v62
  %v1268 = vpop.f32.mrb[0].mxu0
  %v1269 = vadd.f32 %v1194, %v1268
  %v1270 = vpop.f32.mrb[0].mxu0
  %1271 = vdwg.mxu0
  %1272 = vmatprep.subr.mxu0 0.0
  %1273 = vmatpush1.msra.mxu0 %v366
  %1274 = vmatprep.subr.mxu0 0.0
  %1275 = vmatpush1.msra.mxu0 %v367
  %1276 = vmatprep.subr.mxu0 0.0
  %1277 = vmatpush1.msra.mxu0 %v368
  %1278 = vmatprep.subr.mxu0 0.0
  %1279 = vmatpush1.msra.mxu0 %v369
  %1280 = vmatprep.subr.mxu0 0.0
  %1281 = vmatpush1.msra.mxu0 %v370
  %1282 = vmatprep.subr.mxu0 0.0
  %1283 = vmatpush1.msra.mxu0 %v371
  %1284 = vmatprep.subr.mxu0 0.0
  %1285 = vmatpush1.msra.mxu0 %v372
  %1286 = vmatprep.subr.mxu0 0.0
  %1287 = vmatpush1.msra.mxu0 %v373
  %1288 = vmatprep.subr.mxu0 0.0
  %1289 = vmatpush1.msra.mxu0 %v374
  %1290 = vmatprep.subr.mxu0 0.0
  %1291 = vmatpush1.msra.mxu0 %v375
  %1292 = vmatprep.subr.mxu0 0.0
  %1293 = vmatpush1.msra.mxu0 %v376
  %1294 = vmatprep.subr.mxu0 0.0
  %1295 = vmatpush1.msra.mxu0 %v377
  %1296 = vmatprep.subr.mxu0 0.0
  %1297 = vmatpush1.msra.mxu0 %v378
  %1298 = vmatprep.subr.mxu0 0.0
  %1299 = vmatpush1.msra.mxu0 %v379
  %1300 = vmatprep.subr.mxu0 0.0
  %1301 = vmatpush1.msra.mxu0 %v380
  %1302 = vmatprep.subr.mxu0 0.0
  %1303 = vmatpush1.msra.mxu0 %v381
  %1304 = vmatprep.subr.mxu0 0.0
  %1305 = vmatpush1.msra.mxu0 %v382
  %1306 = vmatprep.subr.mxu0 0.0
  %1307 = vmatpush1.msra.mxu0 %v383
  %1308 = vmatprep.subr.mxu0 0.0
  %1309 = vmatpush1.msra.mxu0 %v384
  %1310 = vmatprep.subr.mxu0 0.0
  %1311 = vmatpush1.msra.mxu0 %v385
  %1312 = vmatprep.subr.mxu0 0.0
  %1313 = vmatpush1.msra.mxu0 %v386
  %1314 = vmatprep.subr.mxu0 0.0
  %1315 = vmatpush1.msra.mxu0 %v387
  %1316 = vmatprep.subr.mxu0 0.0
  %1317 = vmatpush1.msra.mxu0 %v388
  %1318 = vmatprep.subr.mxu0 0.0
  %1319 = vmatpush1.msra.mxu0 %v389
  %1320 = vmatprep.subr.mxu0 0.0
  %1321 = vmatpush1.msra.mxu0 %v390
  %1322 = vmatprep.subr.mxu0 0.0
  %1323 = vmatpush1.msra.mxu0 %v391
  %1324 = vmatprep.subr.mxu0 0.0
  %1325 = vmatpush1.msra.mxu0 %v392
  %1326 = vmatprep.subr.mxu0 0.0
  %1327 = vmatpush1.msra.mxu0 %v393
  %1328 = vmatprep.subr.mxu0 0.0
  %1329 = vmatpush1.msra.mxu0 %v394
  %1330 = vmatprep.subr.mxu0 0.0
  %1331 = vmatpush1.msra.mxu0 %v395
  %1332 = vmatprep.subr.mxu0 0.0
  %1333 = vmatpush1.msra.mxu0 %v396
  %1334 = vmatprep.subr.mxu0 0.0
  %1335 = vmatpush1.msra.mxu0 %v397
  %1336 = vmatprep.mubr.f32.mxu0 %v33
  %1337 = vmatmul.mubr.f32.gmra.mrb[0].mxu0 %v32
  %v1338 = vpop.f32.mrb[0].mxu0
  %v1339 = vadd.f32 %v1264, %v1338
  %v1340 = vpop.f32.mrb[0].mxu0
  %1341 = vmatprep.mubr.f32.mxu0 %v65
  %1342 = vmatmul.mubr.f32.gmra.mrb[0].mxu0 %v64
  %v1343 = vpop.f32.mrb[0].mxu0
  %v1344 = vadd.f32 %v1269, %v1343
  %v1345 = vpop.f32.mrb[0].mxu0
  %1346 = vdwg.mxu0
  %1347 = vmatprep.subr.mxu0 0.0
  %1348 = vmatpush1.msra.mxu0 %v398
  %1349 = vmatprep.subr.mxu0 0.0
  %1350 = vmatpush1.msra.mxu0 %v399
  %1351 = vmatprep.subr.mxu0 0.0
  %1352 = vmatpush1.msra.mxu0 %v400
  %1353 = vmatprep.subr.mxu0 0.0
  %1354 = vmatpush1.msra.mxu0 %v401
  %1355 = vmatprep.subr.mxu0 0.0
  %1356 = vmatpush1.msra.mxu0 %v402
  %1357 = vmatprep.subr.mxu0 0.0
  %1358 = vmatpush1.msra.mxu0 %v403
  %1359 = vmatprep.subr.mxu0 0.0
  %1360 = vmatpush1.msra.mxu0 %v404
  %1361 = vmatprep.subr.mxu0 0.0
  %1362 = vmatpush1.msra.mxu0 %v405
  %1363 = vmatprep.subr.mxu0 0.0
  %1364 = vmatpush1.msra.mxu0 %v406
  %1365 = vmatprep.subr.mxu0 0.0
  %1366 = vmatpush1.msra.mxu0 %v407
  %1367 = vmatprep.subr.mxu0 0.0
  %1368 = vmatpush1.msra.mxu0 %v408
  %1369 = vmatprep.subr.mxu0 0.0
  %1370 = vmatpush1.msra.mxu0 %v409
  %1371 = vmatprep.subr.mxu0 0.0
  %1372 = vmatpush1.msra.mxu0 %v410
  %1373 = vmatprep.subr.mxu0 0.0
  %1374 = vmatpush1.msra.mxu0 %v411
  %1375 = vmatprep.subr.mxu0 0.0
  %1376 = vmatpush1.msra.mxu0 %v412
  %1377 = vmatprep.subr.mxu0 0.0
  %1378 = vmatpush1.msra.mxu0 %v413
  %1379 = vmatprep.subr.mxu0 0.0
  %1380 = vmatpush1.msra.mxu0 %v414
  %1381 = vmatprep.subr.mxu0 0.0
  %1382 = vmatpush1.msra.mxu0 %v415
  %1383 = vmatprep.subr.mxu0 0.0
  %1384 = vmatpush1.msra.mxu0 %v416
  %1385 = vmatprep.subr.mxu0 0.0
  %1386 = vmatpush1.msra.mxu0 %v417
  %1387 = vmatprep.subr.mxu0 0.0
  %1388 = vmatpush1.msra.mxu0 %v418
  %1389 = vmatprep.subr.mxu0 0.0
  %1390 = vmatpush1.msra.mxu0 %v419
  %1391 = vmatprep.subr.mxu0 0.0
  %1392 = vmatpush1.msra.mxu0 %v420
  %1393 = vmatprep.subr.mxu0 0.0
  %1394 = vmatpush1.msra.mxu0 %v421
  %1395 = vmatprep.subr.mxu0 0.0
  %1396 = vmatpush1.msra.mxu0 %v422
  %1397 = vmatprep.subr.mxu0 0.0
  %1398 = vmatpush1.msra.mxu0 %v423
  %1399 = vmatprep.subr.mxu0 0.0
  %1400 = vmatpush1.msra.mxu0 %v424
  %1401 = vmatprep.subr.mxu0 0.0
  %1402 = vmatpush1.msra.mxu0 %v425
  %1403 = vmatprep.subr.mxu0 0.0
  %1404 = vmatpush1.msra.mxu0 %v426
  %1405 = vmatprep.subr.mxu0 0.0
  %1406 = vmatpush1.msra.mxu0 %v427
  %1407 = vmatprep.subr.mxu0 0.0
  %1408 = vmatpush1.msra.mxu0 %v428
  %1409 = vmatprep.subr.mxu0 0.0
  %1410 = vmatpush1.msra.mxu0 %v429
  %1411 = vmatprep.mubr.f32.mxu0 %v35
  %1412 = vmatmul.mubr.f32.gmra.mrb[0].mxu0 %v34
  %v1413 = vpop.f32.mrb[0].mxu0
  %v1414 = vadd.f32 %v1339, %v1413
  %v1415 = vpop.f32.mrb[0].mxu0
  %1416 = vmatprep.mubr.f32.mxu0 %v67
  %1417 = vmatmul.mubr.f32.gmra.mrb[0].mxu0 %v66
  %v1418 = vpop.f32.mrb[0].mxu0
  %v1419 = vadd.f32 %v1344, %v1418
  %v1420 = vpop.f32.mrb[0].mxu0
  %1421 = vdwg.mxu0
  %1422 = vmatprep.subr.mxu0 0.0
  %1423 = vmatpush1.msra.mxu0 %v430
  %1424 = vmatprep.subr.mxu0 0.0
  %1425 = vmatpush1.msra.mxu0 %v431
  %1426 = vmatprep.subr.mxu0 0.0
  %1427 = vmatpush1.msra.mxu0 %v432
  %1428 = vmatprep.subr.mxu0 0.0
  %1429 = vmatpush1.msra.mxu0 %v433
  %1430 = vmatprep.subr.mxu0 0.0
  %1431 = vmatpush1.msra.mxu0 %v434
  %1432 = vmatprep.subr.mxu0 0.0
  %1433 = vmatpush1.msra.mxu0 %v435
  %1434 = vmatprep.subr.mxu0 0.0
  %1435 = vmatpush1.msra.mxu0 %v436
  %1436 = vmatprep.subr.mxu0 0.0
  %1437 = vmatpush1.msra.mxu0 %v437
  %1438 = vmatprep.subr.mxu0 0.0
  %1439 = vmatpush1.msra.mxu0 %v438
  %1440 = vmatprep.subr.mxu0 0.0
  %1441 = vmatpush1.msra.mxu0 %v439
  %1442 = vmatprep.subr.mxu0 0.0
  %1443 = vmatpush1.msra.mxu0 %v440
  %1444 = vmatprep.subr.mxu0 0.0
  %1445 = vmatpush1.msra.mxu0 %v441
  %1446 = vmatprep.subr.mxu0 0.0
  %1447 = vmatpush1.msra.mxu0 %v442
  %1448 = vmatprep.subr.mxu0 0.0
  %1449 = vmatpush1.msra.mxu0 %v443
  %1450 = vmatprep.subr.mxu0 0.0
  %1451 = vmatpush1.msra.mxu0 %v444
  %1452 = vmatprep.subr.mxu0 0.0
  %1453 = vmatpush1.msra.mxu0 %v445
  %1454 = vmatprep.subr.mxu0 0.0
  %1455 = vmatpush1.msra.mxu0 %v446
  %1456 = vmatprep.subr.mxu0 0.0
  %1457 = vmatpush1.msra.mxu0 %v447
  %1458 = vmatprep.subr.mxu0 0.0
  %1459 = vmatpush1.msra.mxu0 %v448
  %1460 = vmatprep.subr.mxu0 0.0
  %1461 = vmatpush1.msra.mxu0 %v449
  %1462 = vmatprep.subr.mxu0 0.0
  %1463 = vmatpush1.msra.mxu0 %v450
  %1464 = vmatprep.subr.mxu0 0.0
  %1465 = vmatpush1.msra.mxu0 %v451
  %1466 = vmatprep.subr.mxu0 0.0
  %1467 = vmatpush1.msra.mxu0 %v452
  %1468 = vmatprep.subr.mxu0 0.0
  %1469 = vmatpush1.msra.mxu0 %v453
  %1470 = vmatprep.subr.mxu0 0.0
  %1471 = vmatpush1.msra.mxu0 %v454
  %1472 = vmatprep.subr.mxu0 0.0
  %1473 = vmatpush1.msra.mxu0 %v455
  %1474 = vmatprep.subr.mxu0 0.0
  %1475 = vmatpush1.msra.mxu0 %v456
  %1476 = vmatprep.subr.mxu0 0.0
  %1477 = vmatpush1.msra.mxu0 %v457
  %1478 = vmatprep.subr.mxu0 0.0
  %1479 = vmatpush1.msra.mxu0 %v458
  %1480 = vmatprep.subr.mxu0 0.0
  %1481 = vmatpush1.msra.mxu0 %v459
  %1482 = vmatprep.subr.mxu0 0.0
  %1483 = vmatpush1.msra.mxu0 %v460
  %1484 = vmatprep.subr.mxu0 0.0
  %1485 = vmatpush1.msra.mxu0 %v461
  %1486 = vmatprep.mubr.f32.mxu0 %v37
  %1487 = vmatmul.mubr.f32.gmra.mrb[0].mxu0 %v36
  %v1488 = vpop.f32.mrb[0].mxu0
  %v1489 = vadd.f32 %v1414, %v1488
  %v1490 = vpop.f32.mrb[0].mxu0
  %1491 = vmatprep.mubr.f32.mxu0 %v69
  %1492 = vmatmul.mubr.f32.gmra.mrb[0].mxu0 %v68
  %v1493 = vpop.f32.mrb[0].mxu0
  %v1494 = vadd.f32 %v1419, %v1493
  %v1495 = vpop.f32.mrb[0].mxu0
  %1496 = vdwg.mxu0
  %1497 = vmatprep.subr.mxu0 0.0
  %1498 = vmatpush1.msra.mxu0 %v462
  %1499 = vmatprep.subr.mxu0 0.0
  %1500 = vmatpush1.msra.mxu0 %v463
  %1501 = vmatprep.subr.mxu0 0.0
  %1502 = vmatpush1.msra.mxu0 %v464
  %1503 = vmatprep.subr.mxu0 0.0
  %1504 = vmatpush1.msra.mxu0 %v465
  %1505 = vmatprep.subr.mxu0 0.0
  %1506 = vmatpush1.msra.mxu0 %v466
  %1507 = vmatprep.subr.mxu0 0.0
  %1508 = vmatpush1.msra.mxu0 %v467
  %1509 = vmatprep.subr.mxu0 0.0
  %1510 = vmatpush1.msra.mxu0 %v468
  %1511 = vmatprep.subr.mxu0 0.0
  %1512 = vmatpush1.msra.mxu0 %v469
  %1513 = vmatprep.subr.mxu0 0.0
  %1514 = vmatpush1.msra.mxu0 %v470
  %1515 = vmatprep.subr.mxu0 0.0
  %1516 = vmatpush1.msra.mxu0 %v471
  %1517 = vmatprep.subr.mxu0 0.0
  %1518 = vmatpush1.msra.mxu0 %v472
  %1519 = vmatprep.subr.mxu0 0.0
  %1520 = vmatpush1.msra.mxu0 %v473
  %1521 = vmatprep.subr.mxu0 0.0
  %1522 = vmatpush1.msra.mxu0 %v474
  %1523 = vmatprep.subr.mxu0 0.0
  %1524 = vmatpush1.msra.mxu0 %v475
  %1525 = vmatprep.subr.mxu0 0.0
  %1526 = vmatpush1.msra.mxu0 %v476
  %1527 = vmatprep.subr.mxu0 0.0
  %1528 = vmatpush1.msra.mxu0 %v477
  %1529 = vmatprep.subr.mxu0 0.0
  %1530 = vmatpush1.msra.mxu0 %v478
  %1531 = vmatprep.subr.mxu0 0.0
  %1532 = vmatpush1.msra.mxu0 %v479
  %1533 = vmatprep.subr.mxu0 0.0
  %1534 = vmatpush1.msra.mxu0 %v480
  %1535 = vmatprep.subr.mxu0 0.0
  %1536 = vmatpush1.msra.mxu0 %v481
  %1537 = vmatprep.subr.mxu0 0.0
  %1538 = vmatpush1.msra.mxu0 %v482
  %1539 = vmatprep.subr.mxu0 0.0
  %1540 = vmatpush1.msra.mxu0 %v483
  %1541 = vmatprep.subr.mxu0 0.0
  %1542 = vmatpush1.msra.mxu0 %v484
  %1543 = vmatprep.subr.mxu0 0.0
  %1544 = vmatpush1.msra.mxu0 %v485
  %1545 = vmatprep.subr.mxu0 0.0
  %1546 = vmatpush1.msra.mxu0 %v486
  %1547 = vmatprep.subr.mxu0 0.0
  %1548 = vmatpush1.msra.mxu0 %v487
  %1549 = vmatprep.subr.mxu0 0.0
  %1550 = vmatpush1.msra.mxu0 %v488
  %1551 = vmatprep.subr.mxu0 0.0
  %1552 = vmatpush1.msra.mxu0 %v489
  %1553 = vmatprep.subr.mxu0 0.0
  %1554 = vmatpush1.msra.mxu0 %v490
  %1555 = vmatprep.subr.mxu0 0.0
  %1556 = vmatpush1.msra.mxu0 %v491
  %1557 = vmatprep.subr.mxu0 0.0
  %1558 = vmatpush1.msra.mxu0 %v492
  %1559 = vmatprep.subr.mxu0 0.0
  %1560 = vmatpush1.msra.mxu0 %v493
  %1561 = vmatprep.mubr.f32.mxu0 %v39
  %1562 = vmatmul.mubr.f32.gmra.mrb[0].mxu0 %v38
  %v1563 = vpop.f32.mrb[0].mxu0
  %v1564 = vadd.f32 %v1489, %v1563
  %v1565 = vpop.f32.mrb[0].mxu0
  %1566 = vmatprep.mubr.f32.mxu0 %v71
  %1567 = vmatmul.mubr.f32.gmra.mrb[0].mxu0 %v70
  %v1568 = vpop.f32.mrb[0].mxu0
  %v1569 = vadd.f32 %v1494, %v1568
  %v1570 = vpop.f32.mrb[0].mxu0
  %1571 = vdwg.mxu0
  %1572 = vmatprep.subr.mxu0 0.0
  %1573 = vmatpush1.msra.mxu0 %v494
  %1574 = vmatprep.subr.mxu0 0.0
  %1575 = vmatpush1.msra.mxu0 %v495
  %1576 = vmatprep.subr.mxu0 0.0
  %1577 = vmatpush1.msra.mxu0 %v496
  %1578 = vmatprep.subr.mxu0 0.0
  %1579 = vmatpush1.msra.mxu0 %v497
  %1580 = vmatprep.subr.mxu0 0.0
  %1581 = vmatpush1.msra.mxu0 %v498
  %1582 = vmatprep.subr.mxu0 0.0
  %1583 = vmatpush1.msra.mxu0 %v499
  %1584 = vmatprep.subr.mxu0 0.0
  %1585 = vmatpush1.msra.mxu0 %v500
  %1586 = vmatprep.subr.mxu0 0.0
  %1587 = vmatpush1.msra.mxu0 %v501
  %1588 = vmatprep.subr.mxu0 0.0
  %1589 = vmatpush1.msra.mxu0 %v502
  %1590 = vmatprep.subr.mxu0 0.0
  %1591 = vmatpush1.msra.mxu0 %v503
  %1592 = vmatprep.subr.mxu0 0.0
  %1593 = vmatpush1.msra.mxu0 %v504
  %1594 = vmatprep.subr.mxu0 0.0
  %1595 = vmatpush1.msra.mxu0 %v505
  %1596 = vmatprep.subr.mxu0 0.0
  %1597 = vmatpush1.msra.mxu0 %v506
  %1598 = vmatprep.subr.mxu0 0.0
  %1599 = vmatpush1.msra.mxu0 %v507
  %1600 = vmatprep.subr.mxu0 0.0
  %1601 = vmatpush1.msra.mxu0 %v508
  %1602 = vmatprep.subr.mxu0 0.0
  %1603 = vmatpush1.msra.mxu0 %v509
  %1604 = vmatprep.subr.mxu0 0.0
  %1605 = vmatpush1.msra.mxu0 %v510
  %1606 = vmatprep.subr.mxu0 0.0
  %1607 = vmatpush1.msra.mxu0 %v511
  %1608 = vmatprep.subr.mxu0 0.0
  %1609 = vmatpush1.msra.mxu0 %v512
  %1610 = vmatprep.subr.mxu0 0.0
  %1611 = vmatpush1.msra.mxu0 %v513
  %1612 = vmatprep.subr.mxu0 0.0
  %1613 = vmatpush1.msra.mxu0 %v514
  %1614 = vmatprep.subr.mxu0 0.0
  %1615 = vmatpush1.msra.mxu0 %v515
  %1616 = vmatprep.subr.mxu0 0.0
  %1617 = vmatpush1.msra.mxu0 %v516
  %1618 = vmatprep.subr.mxu0 0.0
  %1619 = vmatpush1.msra.mxu0 %v517
  %1620 = vmatprep.subr.mxu0 0.0
  %1621 = vmatpush1.msra.mxu0 %v518
  %1622 = vmatprep.subr.mxu0 0.0
  %1623 = vmatpush1.msra.mxu0 %v519
  %1624 = vmatprep.subr.mxu0 0.0
  %1625 = vmatpush1.msra.mxu0 %v520
  %1626 = vmatprep.subr.mxu0 0.0
  %1627 = vmatpush1.msra.mxu0 %v521
  %1628 = vmatprep.subr.mxu0 0.0
  %1629 = vmatpush1.msra.mxu0 %v522
  %1630 = vmatprep.subr.mxu0 0.0
  %1631 = vmatpush1.msra.mxu0 %v523
  %1632 = vmatprep.subr.mxu0 0.0
  %1633 = vmatpush1.msra.mxu0 %v524
  %1634 = vmatprep.subr.mxu0 0.0
  %1635 = vmatpush1.msra.mxu0 %v525
  %1636 = vmatprep.mubr.f32.mxu0 %v41
  %1637 = vmatmul.mubr.f32.gmra.mrb[0].mxu0 %v40
  %v1638 = vpop.f32.mrb[0].mxu0
  %v1639 = vadd.f32 %v1564, %v1638
  %v1640 = vpop.f32.mrb[0].mxu0
  %1641 = vmatprep.mubr.f32.mxu0 %v73
  %1642 = vmatmul.mubr.f32.gmra.mrb[0].mxu0 %v72
  %v1643 = vpop.f32.mrb[0].mxu0
  %v1644 = vadd.f32 %v1569, %v1643
  %v1645 = vpop.f32.mrb[0].mxu0
  %1646 = vdwg.mxu0
  %1647 = vmatprep.subr.mxu0 0.0
  %1648 = vmatpush1.msra.mxu0 %v526
  %1649 = vmatprep.subr.mxu0 0.0
  %1650 = vmatpush1.msra.mxu0 %v527
  %1651 = vmatprep.subr.mxu0 0.0
  %1652 = vmatpush1.msra.mxu0 %v528
  %1653 = vmatprep.subr.mxu0 0.0
  %1654 = vmatpush1.msra.mxu0 %v529
  %1655 = vmatprep.subr.mxu0 0.0
  %1656 = vmatpush1.msra.mxu0 %v530
  %1657 = vmatprep.subr.mxu0 0.0
  %1658 = vmatpush1.msra.mxu0 %v531
  %1659 = vmatprep.subr.mxu0 0.0
  %1660 = vmatpush1.msra.mxu0 %v532
  %1661 = vmatprep.subr.mxu0 0.0
  %1662 = vmatpush1.msra.mxu0 %v533
  %1663 = vmatprep.subr.mxu0 0.0
  %1664 = vmatpush1.msra.mxu0 %v534
  %1665 = vmatprep.subr.mxu0 0.0
  %1666 = vmatpush1.msra.mxu0 %v535
  %1667 = vmatprep.subr.mxu0 0.0
  %1668 = vmatpush1.msra.mxu0 %v536
  %1669 = vmatprep.subr.mxu0 0.0
  %1670 = vmatpush1.msra.mxu0 %v537
  %1671 = vmatprep.subr.mxu0 0.0
  %1672 = vmatpush1.msra.mxu0 %v538
  %1673 = vmatprep.subr.mxu0 0.0
  %1674 = vmatpush1.msra.mxu0 %v539
  %1675 = vmatprep.subr.mxu0 0.0
  %1676 = vmatpush1.msra.mxu0 %v540
  %1677 = vmatprep.subr.mxu0 0.0
  %1678 = vmatpush1.msra.mxu0 %v541
  %1679 = vmatprep.subr.mxu0 0.0
  %1680 = vmatpush1.msra.mxu0 %v542
  %1681 = vmatprep.subr.mxu0 0.0
  %1682 = vmatpush1.msra.mxu0 %v543
  %1683 = vmatprep.subr.mxu0 0.0
  %1684 = vmatpush1.msra.mxu0 %v544
  %1685 = vmatprep.subr.mxu0 0.0
  %1686 = vmatpush1.msra.mxu0 %v545
  %1687 = vmatprep.subr.mxu0 0.0
  %1688 = vmatpush1.msra.mxu0 %v546
  %1689 = vmatprep.subr.mxu0 0.0
  %1690 = vmatpush1.msra.mxu0 %v547
  %1691 = vmatprep.subr.mxu0 0.0
  %1692 = vmatpush1.msra.mxu0 %v548
  %1693 = vmatprep.subr.mxu0 0.0
  %1694 = vmatpush1.msra.mxu0 %v549
  %1695 = vmatprep.subr.mxu0 0.0
  %1696 = vmatpush1.msra.mxu0 %v550
  %1697 = vmatprep.subr.mxu0 0.0
  %1698 = vmatpush1.msra.mxu0 %v551
  %1699 = vmatprep.subr.mxu0 0.0
  %1700 = vmatpush1.msra.mxu0 %v552
  %1701 = vmatprep.subr.mxu0 0.0
  %1702 = vmatpush1.msra.mxu0 %v553
  %1703 = vmatprep.subr.mxu0 0.0
  %1704 = vmatpush1.msra.mxu0 %v554
  %1705 = vmatprep.subr.mxu0 0.0
  %1706 = vmatpush1.msra.mxu0 %v555
  %1707 = vmatprep.subr.mxu0 0.0
  %1708 = vmatpush1.msra.mxu0 %v556
  %1709 = vmatprep.subr.mxu0 0.0
  %1710 = vmatpush1.msra.mxu0 %v557
  %1711 = vmatprep.mubr.f32.mxu0 %v43
  %1712 = vmatmul.mubr.f32.gmra.mrb[0].mxu0 %v42
  %v1713 = vpop.f32.mrb[0].mxu0
  %v1714 = vadd.f32 %v1639, %v1713
  %v1715 = vpop.f32.mrb[0].mxu0
  %1716 = vmatprep.mubr.f32.mxu0 %v75
  %1717 = vmatmul.mubr.f32.gmra.mrb[0].mxu0 %v74
  %v1718 = vpop.f32.mrb[0].mxu0
  %v1719 = vadd.f32 %v1644, %v1718
  %v1720 = vpop.f32.mrb[0].mxu0
  %1721 = vdwg.mxu0
  %1722 = vmatprep.subr.mxu0 0.0
  %1723 = vmatpush1.msra.mxu0 %v558
  %1724 = vmatprep.subr.mxu0 0.0
  %1725 = vmatpush1.msra.mxu0 %v559
  %1726 = vmatprep.subr.mxu0 0.0
  %1727 = vmatpush1.msra.mxu0 %v560
  %1728 = vmatprep.subr.mxu0 0.0
  %1729 = vmatpush1.msra.mxu0 %v561
  %1730 = vmatprep.subr.mxu0 0.0
  %1731 = vmatpush1.msra.mxu0 %v562
  %1732 = vmatprep.subr.mxu0 0.0
  %1733 = vmatpush1.msra.mxu0 %v563
  %1734 = vmatprep.subr.mxu0 0.0
  %1735 = vmatpush1.msra.mxu0 %v564
  %1736 = vmatprep.subr.mxu0 0.0
  %1737 = vmatpush1.msra.mxu0 %v565
  %1738 = vmatprep.subr.mxu0 0.0
  %1739 = vmatpush1.msra.mxu0 %v566
  %1740 = vmatprep.subr.mxu0 0.0
  %1741 = vmatpush1.msra.mxu0 %v567
  %1742 = vmatprep.subr.mxu0 0.0
  %1743 = vmatpush1.msra.mxu0 %v568
  %1744 = vmatprep.subr.mxu0 0.0
  %1745 = vmatpush1.msra.mxu0 %v569
  %1746 = vmatprep.subr.mxu0 0.0
  %1747 = vmatpush1.msra.mxu0 %v570
  %1748 = vmatprep.subr.mxu0 0.0
  %1749 = vmatpush1.msra.mxu0 %v571
  %1750 = vmatprep.subr.mxu0 0.0
  %1751 = vmatpush1.msra.mxu0 %v572
  %1752 = vmatprep.subr.mxu0 0.0
  %1753 = vmatpush1.msra.mxu0 %v573
  %1754 = vmatprep.subr.mxu0 0.0
  %1755 = vmatpush1.msra.mxu0 %v574
  %1756 = vmatprep.subr.mxu0 0.0
  %1757 = vmatpush1.msra.mxu0 %v575
  %1758 = vmatprep.subr.mxu0 0.0
  %1759 = vmatpush1.msra.mxu0 %v576
  %1760 = vmatprep.subr.mxu0 0.0
  %1761 = vmatpush1.msra.mxu0 %v577
  %1762 = vmatprep.subr.mxu0 0.0
  %1763 = vmatpush1.msra.mxu0 %v578
  %1764 = vmatprep.subr.mxu0 0.0
  %1765 = vmatpush1.msra.mxu0 %v579
  %1766 = vmatprep.subr.mxu0 0.0
  %1767 = vmatpush1.msra.mxu0 %v580
  %1768 = vmatprep.subr.mxu0 0.0
  %1769 = vmatpush1.msra.mxu0 %v581
  %1770 = vmatprep.subr.mxu0 0.0
  %1771 = vmatpush1.msra.mxu0 %v582
  %1772 = vmatprep.subr.mxu0 0.0
  %1773 = vmatpush1.msra.mxu0 %v583
  %1774 = vmatprep.subr.mxu0 0.0
  %1775 = vmatpush1.msra.mxu0 %v584
  %1776 = vmatprep.subr.mxu0 0.0
  %1777 = vmatpush1.msra.mxu0 %v585
  %1778 = vmatprep.subr.mxu0 0.0
  %1779 = vmatpush1.msra.mxu0 %v586
  %1780 = vmatprep.subr.mxu0 0.0
  %1781 = vmatpush1.msra.mxu0 %v587
  %1782 = vmatprep.subr.mxu0 0.0
  %1783 = vmatpush1.msra.mxu0 %v588
  %1784 = vmatprep.subr.mxu0 0.0
  %1785 = vmatpush1.msra.mxu0 %v589
  %1786 = vmatprep.mubr.f32.mxu0 %v45
  %1787 = vmatmul.mubr.f32.gmra.mrb[0].mxu0 %v44
  %v1788 = vpop.f32.mrb[0].mxu0
  %v1789 = vadd.f32 %v1714, %v1788
  %v1790 = vpop.f32.mrb[0].mxu0
  %1791 = vmatprep.mubr.f32.mxu0 %v77
  %1792 = vmatmul.mubr.f32.gmra.mrb[0].mxu0 %v76
  %v1793 = vpop.f32.mrb[0].mxu0
  %v1794 = vadd.f32 %v1719, %v1793
  %v1795 = vpop.f32.mrb[0].mxu0
  %1796 = vdwg.mxu0
  %v1797 = vxor.u32 %v1789, 2147483648
  %v1798 = vxor.u32 %v1794, 2147483648
  %v1799 = vmul.f32 %v1797, 1.442695
  %v1800 = vpow.pop %v1799
  %v1801 = vmul.f32 %v1798, 1.442695
  %v1802 = vpow.pop %v1801
  %v1803 = vadd.f32 %v1800, 1.0
  %v1804 = vadd.f32 %v1802, 1.0
  %v1805 = vrcp.pop %v1803
  %v1806 = vmul.f32 1.0, %v1805
  %v1807 = vrcp.pop %v1804
  %v1808 = vmul.f32 1.0, %v1807
  %1809 = vst [vmem:[%s3] sm:$0xff] %v1806
  %1810 = vst [vmem:[%s3 + $0x8] sm:$0x1f] %v1808
  // Predicated region
  $region14: #{bayesian_network_forward.1} parent=0 // pred_check
    _
  $region15: #{bayesian_network_forward.1} parent=0 // pred_check_branch
    %1812 = sbr.rel (0) target = $region17
  $region16: #{bayesian_network_forward.1} parent=0 // pred_region
    _
  $region17: #{bayesian_network_forward.1} parent=0 // pred_fallthru
    _
  // Predicated region
  $region18: #{bayesian_network_forward.1} parent=0 // pred_check
    _
  $region19: #{bayesian_network_forward.1} parent=0 // pred_check_branch
    %1814 = sbr.rel (0) target = $region21
  $region20: #{bayesian_network_forward.1} parent=0 // pred_region
    _
  $region21: #{bayesian_network_forward.1} parent=0 // pred_fallthru
    _

</llo_original>
